<compile_context>
chip_gen: v6e
topology: v6e:2x2x1
jax: 0.10.0
libtpu: 0.0.40
codegen_flags: <defaults>
</compile_context>

<pallas_src>
import jax
import jax.numpy as jnp
from jax import lax
from jax.experimental import pallas as pl
from jax.experimental.pallas import tpu as pltpu

NEG_SLOPE = 0.01  # torch.nn.LeakyReLU default negative_slope


def _leaky_relu(v):
    return jnp.where(v >= 0, v, NEG_SLOPE * v)


# ----------------------------- Fused Pallas kernel ---------------------------
def _make_encoder_kernel(n_batch, oh1, ow1, oh2, ow2):
    """Builds the fused encoder kernel for static shapes."""
    K2, S2 = 4, 2  # conv2 kernel size / stride (fixed by the module)

    def kernel(p1_ref, w1_ref, b1_ref, w2_ref, b2_ref, w3_ref, b3_ref,
               o_ref, h1_ref, p2_ref, h2_ref, flat_ref):
        c1 = h1_ref.shape[1]   # conv1 out channels (16)
        c2 = h2_ref.shape[1]   # conv2 out channels (32)

        # ---- conv1: one MXU matmul over the im2col'd patches + bias + LeakyReLU.
        h1 = jnp.dot(p1_ref[...], w1_ref[...], preferred_element_type=jnp.float32)
        h1_ref[...] = _leaky_relu(h1 + b1_ref[...])

        # ---- conv2 im2col, fully in VMEM with static ref slices.
        # h1 rows are indexed (n, h, w) -> n*oh1*ow1 + h*ow1 + w, channels on lanes.
        # p2 rows are ordered (spatial position p, batch n); columns (kh, kw, c).
        for p in range(oh2 * ow2):
            oh, ow = p // ow2, p % ow2
            for n in range(n_batch):
                row = p * n_batch + n
                for i in range(K2):
                    src = n * oh1 * ow1 + (S2 * oh + i) * ow1 + S2 * ow
                    for j in range(K2):
                        col = (i * K2 + j) * c1
                        p2_ref[row:row + 1, col:col + c1] = \
                            h1_ref[src + j:src + j + 1, :]

        # ---- conv2 matmul + bias + LeakyReLU (stays in VMEM).
        h2 = jnp.dot(p2_ref[...].astype(w2_ref.dtype), w2_ref[...],
                     preferred_element_type=jnp.float32)
        h2_ref[...] = _leaky_relu(h2 + b2_ref[...])

        # ---- flatten to (N, oh2*ow2*c2); column order (oh2, ow2, c2) matches the
        # host-side permutation of the dense weight (== torch's NCHW flatten).
        for n in range(n_batch):
            for p in range(oh2 * ow2):
                flat_ref[n:n + 1, p * c2:(p + 1) * c2] = \
                    h2_ref[p * n_batch + n:p * n_batch + n + 1, :]

        # ---- dense + bias + LeakyReLU -> the only HBM store of the kernel.
        out = jnp.dot(flat_ref[...].astype(w3_ref.dtype), w3_ref[...],
                      preferred_element_type=jnp.float32)
        o_ref[...] = _leaky_relu(out + b3_ref[...]).astype(o_ref.dtype)

    return kernel


# ------------------------------ Forward wrapper -------------------------------
def simple_visual_encoder_forward(x, params, *, compute_dtype=jnp.float32):
    """Pallas implementation of SimpleVisualEncoder.forward.  x: (N, C, H, W) f32."""
    w1, b1, w2, b2, w3, b3 = params
    n, c_in, height, width = x.shape
    c1, c2 = w1.shape[0], w2.shape[0]
    out_dim = w3.shape[0]
    oh1, ow1 = (height - 8) // 4 + 1, (width - 8) // 4 + 1
    oh2, ow2 = (oh1 - 4) // 2 + 1, (ow1 - 4) // 2 + 1
    final_flat = oh2 * ow2 * c2

    # ---- conv1 im2col on the host: gather-free static strided slices (fused by XLA).
    x_nhwc = jnp.transpose(x, (0, 2, 3, 1))
    cols = []
    for i in range(8):
        for j in range(8):
            cols.append(x_nhwc[:, i:i + 4 * (oh1 - 1) + 1:4,
                               j:j + 4 * (ow1 - 1) + 1:4, :])   # (N, oh1, ow1, C)
    p1 = jnp.concatenate(cols, axis=-1).reshape(n * oh1 * ow1, 8 * 8 * c_in)
    m1 = n * oh1 * ow1
    m1p = ((m1 + 7) // 8) * 8            # sublane-align the matmul M dim
    if m1p != m1:
        p1 = jnp.pad(p1, ((0, m1p - m1), (0, 0)))
    p1 = p1.astype(compute_dtype)

    # ---- one-time weight permutations to the channels-last patch/flatten order.
    w1m = jnp.transpose(w1, (2, 3, 1, 0)).reshape(8 * 8 * c_in, c1).astype(compute_dtype)
    w2m = jnp.transpose(w2, (2, 3, 1, 0)).reshape(4 * 4 * c1, c2).astype(compute_dtype)
    w3m = jnp.transpose(w3.reshape(out_dim, c2, oh2, ow2),
                        (2, 3, 1, 0)).reshape(final_flat, out_dim).astype(compute_dtype)
    b1r = b1.reshape(1, c1).astype(jnp.float32)
    b2r = b2.reshape(1, c2).astype(jnp.float32)
    b3r = b3.reshape(1, out_dim).astype(jnp.float32)

    kernel = _make_encoder_kernel(n, oh1, ow1, oh2, ow2)
    return pl.pallas_call(
        kernel,
        out_shape=jax.ShapeDtypeStruct((n, out_dim), jnp.float32),
        grid=(1,),
        in_specs=[
            pl.BlockSpec((m1p, 8 * 8 * c_in), lambda g: (0, 0)),   # conv1 patches
            pl.BlockSpec((8 * 8 * c_in, c1), lambda g: (0, 0)),    # w1 (K, c1)
            pl.BlockSpec((1, c1), lambda g: (0, 0)),               # b1
            pl.BlockSpec((4 * 4 * c1, c2), lambda g: (0, 0)),      # w2 (K, c2)
            pl.BlockSpec((1, c2), lambda g: (0, 0)),               # b2
            pl.BlockSpec((final_flat, out_dim), lambda g: (0, 0)),  # w3 (K, out)
            pl.BlockSpec((1, out_dim), lambda g: (0, 0)),          # b3
        ],
        out_specs=pl.BlockSpec((n, out_dim), lambda g: (0, 0)),
        scratch_shapes=[
            pltpu.VMEM((m1p, c1), jnp.float32),                    # h1 (conv1 out)
            pltpu.VMEM((n * oh2 * ow2, 4 * 4 * c1), jnp.float32),  # conv2 patches
            pltpu.VMEM((n * oh2 * ow2, c2), jnp.float32),          # h2 (conv2 out)
            pltpu.VMEM((n, final_flat), jnp.float32),              # flattened features
        ],
        compiler_params=pltpu.CompilerParams(
            dimension_semantics=("arbitrary",)),
    )(p1, w1m, b1r, w2m, b2r, w3m, b3r)


# ------------------------------ Reference -------------------------------------
def reference_forward(x, params):
    w1, b1, w2, b2, w3, b3 = params
    dn = ("NCHW", "OIHW", "NCHW")
    h = lax.conv_general_dilated(x, w1, (4, 4), "VALID", dimension_numbers=dn)
    h = _leaky_relu(h + b1[None, :, None, None])
    h = lax.conv_general_dilated(h, w2, (2, 2), "VALID", dimension_numbers=dn)
    h = _leaky_relu(h + b2[None, :, None, None])
    flat = h.reshape(x.shape[0], -1)
    return _leaky_relu(flat @ w3.T + b3)


# ------------------------------- Main -----------------------------------------
if __name__ == "__main__":
    # Shapes consistent with the module: height = width = 32, initial_channels = 4,
    # output_size = 32, batch = 2.  conv1 out: 7x7x16 ; conv2 out: 2x2x32 ; flat = 128.
    N, C, H, W = 2, 4, 32, 32
    OUT = 32
    oh1, ow1 = (H - 8) // 4 + 1, (W - 8) // 4 + 1
    oh2, ow2 = (oh1 - 4) // 2 + 1, (ow1 - 4) // 2 + 1
    final_flat = oh2 * ow2 * 32

    key = jax.random.PRNGKey(0)
    kx, k1, k2, k3, k4, k5 = jax.random.split(key, 6)

    x = jax.random.normal(kx, (N, C, H, W), jnp.float32)

    # Deterministic synthetic parameters (shapes follow the module __init__).
    w1 = jax.random.normal(k1, (16, C, 8, 8), jnp.float32) * 0.05
    b1 = jax.random.normal(k2, (16,), jnp.float32) * 0.05
    w2 = jax.random.normal(k3, (32, 16, 4, 4), jnp.float32) * 0.05
    b2 = jax.random.normal(k4, (32,), jnp.float32) * 0.05
    # dense: KaimingHeNormal-like scale * kernel_gain 1.41, zero bias
    w3 = jax.random.normal(k5, (OUT, final_flat), jnp.float32) * (
        jnp.sqrt(2.0 / final_flat) * 1.41
    )
    b3 = jnp.zeros((OUT,), jnp.float32)
    params = (w1, b1, w2, b2, w3, b3)

    fwd = jax.jit(simple_visual_encoder_forward, static_argnames=("compute_dtype",))

    # f32 path (default): strict check against the f32 reference.
    out = jax.block_until_ready(fwd(x, params))
    assert out.shape == (N, OUT), out.shape
    ref = jax.block_until_ready(reference_forward(x, params))
    assert jnp.allclose(out, ref, rtol=1e-4, atol=1e-4), float(jnp.max(jnp.abs(out - ref)))

    # bf16 MXU operands with f32 accumulation (v5e/v6e/v7x feedback); looser check.
    out_bf16 = jax.block_until_ready(fwd(x, params, compute_dtype=jnp.bfloat16))
    assert jnp.allclose(out_bf16, ref, rtol=1e-1, atol=1e-1), float(
        jnp.max(jnp.abs(out_bf16 - ref))
    )

    print("KERNEL_OK")
</pallas_src>

<mosaic_0001>
module attributes {stable_mosaic.version = 11 : i64} {
  func.func @kernel(%arg0: i32, %arg1: memref<104x256xf32, #tpu.memory_space<vmem>>, %arg2: memref<256x16xf32, #tpu.memory_space<vmem>>, %arg3: memref<1x16xf32, #tpu.memory_space<vmem>>, %arg4: memref<256x32xf32, #tpu.memory_space<vmem>>, %arg5: memref<1x32xf32, #tpu.memory_space<vmem>>, %arg6: memref<128x32xf32, #tpu.memory_space<vmem>>, %arg7: memref<1x32xf32, #tpu.memory_space<vmem>>, %arg8: memref<2x32xf32, #tpu.memory_space<vmem>>, %arg9: memref<104x16xf32, #tpu.memory_space<vmem>>, %arg10: memref<8x256xf32, #tpu.memory_space<vmem>>, %arg11: memref<8x32xf32, #tpu.memory_space<vmem>>, %arg12: memref<2x128xf32, #tpu.memory_space<vmem>>) attributes {dimension_semantics = [#tpu.dimension_semantics<arbitrary>], iteration_bounds = array<i64: 1>, scalar_prefetch = 0 : i64, scratch_operands = 4 : i64, tpu.core_type = #tpu.core_type<tc>, window_params = [{pipeline_mode = #tpu.pipeline_mode<synchronous>, transform_indices = @transform_0, window_bounds = array<i64: 104, 256>}, {pipeline_mode = #tpu.pipeline_mode<synchronous>, transform_indices = @transform_1, window_bounds = array<i64: 256, 16>}, {pipeline_mode = #tpu.pipeline_mode<synchronous>, transform_indices = @transform_2, window_bounds = array<i64: 1, 16>}, {pipeline_mode = #tpu.pipeline_mode<synchronous>, transform_indices = @transform_3, window_bounds = array<i64: 256, 32>}, {pipeline_mode = #tpu.pipeline_mode<synchronous>, transform_indices = @transform_4, window_bounds = array<i64: 1, 32>}, {pipeline_mode = #tpu.pipeline_mode<synchronous>, transform_indices = @transform_5, window_bounds = array<i64: 128, 32>}, {pipeline_mode = #tpu.pipeline_mode<synchronous>, transform_indices = @transform_6, window_bounds = array<i64: 1, 32>}, {pipeline_mode = #tpu.pipeline_mode<synchronous>, transform_indices = @transform_7, window_bounds = array<i64: 2, 32>}]} {
    %c0 = arith.constant 0 : index
    %c0_0 = arith.constant 0 : index
    %0 = vector.load %arg1[%c0, %c0_0] : memref<104x256xf32, #tpu.memory_space<vmem>>, vector<104x256xf32>
    %c0_1 = arith.constant 0 : index
    %c0_2 = arith.constant 0 : index
    %1 = vector.load %arg2[%c0_1, %c0_2] : memref<256x16xf32, #tpu.memory_space<vmem>>, vector<256x16xf32>
    %cst = arith.constant dense<0.000000e+00> : vector<104x16xf32>
    %2 = tpu.matmul %0, %1, %cst {dimension_numbers = #tpu.dot_dimension_numbers<[1], [0], [0], [1], [0, 0, 1, 1], [], []>} : vector<104x256xf32>, vector<256x16xf32>, vector<104x16xf32> -> vector<104x16xf32>
    %c0_3 = arith.constant 0 : index
    %c0_4 = arith.constant 0 : index
    %3 = vector.load %arg3[%c0_3, %c0_4] : memref<1x16xf32, #tpu.memory_space<vmem>>, vector<1x16xf32>
    %4 = vector.broadcast %3 : vector<1x16xf32> to vector<104x16xf32>
    %5 = arith.addf %2, %4 : vector<104x16xf32>
    %cst_5 = arith.constant 0.000000e+00 : f32
    %6 = vector.broadcast %cst_5 : f32 to vector<104x16xf32>
    %7 = arith.cmpf oge, %5, %6 : vector<104x16xf32>
    %cst_6 = arith.constant 0.00999999977 : f32
    %8 = vector.broadcast %cst_6 : f32 to vector<104x16xf32>
    %9 = arith.mulf %8, %5 : vector<104x16xf32>
    %10 = arith.select %7, %5, %9 : vector<104x16xi1>, vector<104x16xf32>
    %c0_7 = arith.constant 0 : index
    %c0_8 = arith.constant 0 : index
    %11 = vector.load %arg9[%c0_7, %c0_8] : memref<104x16xf32, #tpu.memory_space<vmem>>, vector<104x16xf32>
    tpu.vector_store %arg9[%c0_7, %c0_8], %10 {strides = array<i32>} : memref<104x16xf32, #tpu.memory_space<vmem>>, vector<104x16xf32>,
    %c0_9 = arith.constant 0 : index
    %c0_10 = arith.constant 0 : index
    %12 = vector.load %arg9[%c0_9, %c0_10] : memref<104x16xf32, #tpu.memory_space<vmem>>, vector<1x16xf32>
    %c0_11 = arith.constant 0 : index
    %c0_12 = arith.constant 0 : index
    %13 = vector.load %arg10[%c0_11, %c0_12] : memref<8x256xf32, #tpu.memory_space<vmem>>, vector<1x16xf32>
    tpu.vector_store %arg10[%c0_11, %c0_12], %12 {strides = array<i32>} : memref<8x256xf32, #tpu.memory_space<vmem>>, vector<1x16xf32>,
    %c1 = arith.constant 1 : index
    %c0_13 = arith.constant 0 : index
    %14 = vector.load %arg9[%c1, %c0_13] : memref<104x16xf32, #tpu.memory_space<vmem>>, vector<1x16xf32>
    %c0_14 = arith.constant 0 : index
    %c16 = arith.constant 16 : index
    %15 = vector.load %arg10[%c0_14, %c16] : memref<8x256xf32, #tpu.memory_space<vmem>>, vector<1x16xf32>
    tpu.vector_store %arg10[%c0_14, %c16], %14 {strides = array<i32>} : memref<8x256xf32, #tpu.memory_space<vmem>>, vector<1x16xf32>,
    %c2 = arith.constant 2 : index
    %c0_15 = arith.constant 0 : index
    %16 = vector.load %arg9[%c2, %c0_15] : memref<104x16xf32, #tpu.memory_space<vmem>>, vector<1x16xf32>
    %c0_16 = arith.constant 0 : index
    %c32 = arith.constant 32 : index
    %17 = vector.load %arg10[%c0_16, %c32] : memref<8x256xf32, #tpu.memory_space<vmem>>, vector<1x16xf32>
    tpu.vector_store %arg10[%c0_16, %c32], %16 {strides = array<i32>} : memref<8x256xf32, #tpu.memory_space<vmem>>, vector<1x16xf32>,
    %c3 = arith.constant 3 : index
    %c0_17 = arith.constant 0 : index
    %18 = vector.load %arg9[%c3, %c0_17] : memref<104x16xf32, #tpu.memory_space<vmem>>, vector<1x16xf32>
    %c0_18 = arith.constant 0 : index
    %c48 = arith.constant 48 : index
    %19 = vector.load %arg10[%c0_18, %c48] : memref<8x256xf32, #tpu.memory_space<vmem>>, vector<1x16xf32>
    tpu.vector_store %arg10[%c0_18, %c48], %18 {strides = array<i32>} : memref<8x256xf32, #tpu.memory_space<vmem>>, vector<1x16xf32>,
    %c7 = arith.constant 7 : index
    %c0_19 = arith.constant 0 : index
    %20 = vector.load %arg9[%c7, %c0_19] : memref<104x16xf32, #tpu.memory_space<vmem>>, vector<1x16xf32>
    %c0_20 = arith.constant 0 : index
    %c64 = arith.constant 64 : index
    %21 = vector.load %arg10[%c0_20, %c64] : memref<8x256xf32, #tpu.memory_space<vmem>>, vector<1x16xf32>
    tpu.vector_store %arg10[%c0_20, %c64], %20 {strides = array<i32>} : memref<8x256xf32, #tpu.memory_space<vmem>>, vector<1x16xf32>,
    %c8 = arith.constant 8 : index
    %c0_21 = arith.constant 0 : index
    %22 = vector.load %arg9[%c8, %c0_21] : memref<104x16xf32, #tpu.memory_space<vmem>>, vector<1x16xf32>
    %c0_22 = arith.constant 0 : index
    %c80 = arith.constant 80 : index
    %23 = vector.load %arg10[%c0_22, %c80] : memref<8x256xf32, #tpu.memory_space<vmem>>, vector<1x16xf32>
    tpu.vector_store %arg10[%c0_22, %c80], %22 {strides = array<i32>} : memref<8x256xf32, #tpu.memory_space<vmem>>, vector<1x16xf32>,
    %c9 = arith.constant 9 : index
    %c0_23 = arith.constant 0 : index
    %24 = vector.load %arg9[%c9, %c0_23] : memref<104x16xf32, #tpu.memory_space<vmem>>, vector<1x16xf32>
    %c0_24 = arith.constant 0 : index
    %c96 = arith.constant 96 : index
    %25 = vector.load %arg10[%c0_24, %c96] : memref<8x256xf32, #tpu.memory_space<vmem>>, vector<1x16xf32>
    tpu.vector_store %arg10[%c0_24, %c96], %24 {strides = array<i32>} : memref<8x256xf32, #tpu.memory_space<vmem>>, vector<1x16xf32>,
    %c10 = arith.constant 10 : index
    %c0_25 = arith.constant 0 : index
    %26 = vector.load %arg9[%c10, %c0_25] : memref<104x16xf32, #tpu.memory_space<vmem>>, vector<1x16xf32>
    %c0_26 = arith.constant 0 : index
    %c112 = arith.constant 112 : index
    %27 = vector.load %arg10[%c0_26, %c112] : memref<8x256xf32, #tpu.memory_space<vmem>>, vector<1x16xf32>
    tpu.vector_store %arg10[%c0_26, %c112], %26 {strides = array<i32>} : memref<8x256xf32, #tpu.memory_space<vmem>>, vector<1x16xf32>,
    %c14 = arith.constant 14 : index
    %c0_27 = arith.constant 0 : index
    %28 = vector.load %arg9[%c14, %c0_27] : memref<104x16xf32, #tpu.memory_space<vmem>>, vector<1x16xf32>
    %c0_28 = arith.constant 0 : index
    %c128 = arith.constant 128 : index
    %29 = vector.load %arg10[%c0_28, %c128] : memref<8x256xf32, #tpu.memory_space<vmem>>, vector<1x16xf32>
    tpu.vector_store %arg10[%c0_28, %c128], %28 {strides = array<i32>} : memref<8x256xf32, #tpu.memory_space<vmem>>, vector<1x16xf32>,
    %c15 = arith.constant 15 : index
    %c0_29 = arith.constant 0 : index
    %30 = vector.load %arg9[%c15, %c0_29] : memref<104x16xf32, #tpu.memory_space<vmem>>, vector<1x16xf32>
    %c0_30 = arith.constant 0 : index
    %c144 = arith.constant 144 : index
    %31 = vector.load %arg10[%c0_30, %c144] : memref<8x256xf32, #tpu.memory_space<vmem>>, vector<1x16xf32>
    tpu.vector_store %arg10[%c0_30, %c144], %30 {strides = array<i32>} : memref<8x256xf32, #tpu.memory_space<vmem>>, vector<1x16xf32>,
    %c16_31 = arith.constant 16 : index
    %c0_32 = arith.constant 0 : index
    %32 = vector.load %arg9[%c16_31, %c0_32] : memref<104x16xf32, #tpu.memory_space<vmem>>, vector<1x16xf32>
    %c0_33 = arith.constant 0 : index
    %c160 = arith.constant 160 : index
    %33 = vector.load %arg10[%c0_33, %c160] : memref<8x256xf32, #tpu.memory_space<vmem>>, vector<1x16xf32>
    tpu.vector_store %arg10[%c0_33, %c160], %32 {strides = array<i32>} : memref<8x256xf32, #tpu.memory_space<vmem>>, vector<1x16xf32>,
    %c17 = arith.constant 17 : index
    %c0_34 = arith.constant 0 : index
    %34 = vector.load %arg9[%c17, %c0_34] : memref<104x16xf32, #tpu.memory_space<vmem>>, vector<1x16xf32>
    %c0_35 = arith.constant 0 : index
    %c176 = arith.constant 176 : index
    %35 = vector.load %arg10[%c0_35, %c176] : memref<8x256xf32, #tpu.memory_space<vmem>>, vector<1x16xf32>
    tpu.vector_store %arg10[%c0_35, %c176], %34 {strides = array<i32>} : memref<8x256xf32, #tpu.memory_space<vmem>>, vector<1x16xf32>,
    %c21 = arith.constant 21 : index
    %c0_36 = arith.constant 0 : index
    %36 = vector.load %arg9[%c21, %c0_36] : memref<104x16xf32, #tpu.memory_space<vmem>>, vector<1x16xf32>
    %c0_37 = arith.constant 0 : index
    %c192 = arith.constant 192 : index
    %37 = vector.load %arg10[%c0_37, %c192] : memref<8x256xf32, #tpu.memory_space<vmem>>, vector<1x16xf32>
    tpu.vector_store %arg10[%c0_37, %c192], %36 {strides = array<i32>} : memref<8x256xf32, #tpu.memory_space<vmem>>, vector<1x16xf32>,
    %c22 = arith.constant 22 : index
    %c0_38 = arith.constant 0 : index
    %38 = vector.load %arg9[%c22, %c0_38] : memref<104x16xf32, #tpu.memory_space<vmem>>, vector<1x16xf32>
    %c0_39 = arith.constant 0 : index
    %c208 = arith.constant 208 : index
    %39 = vector.load %arg10[%c0_39, %c208] : memref<8x256xf32, #tpu.memory_space<vmem>>, vector<1x16xf32>
    tpu.vector_store %arg10[%c0_39, %c208], %38 {strides = array<i32>} : memref<8x256xf32, #tpu.memory_space<vmem>>, vector<1x16xf32>,
    %c23 = arith.constant 23 : index
    %c0_40 = arith.constant 0 : index
    %40 = vector.load %arg9[%c23, %c0_40] : memref<104x16xf32, #tpu.memory_space<vmem>>, vector<1x16xf32>
    %c0_41 = arith.constant 0 : index
    %c224 = arith.constant 224 : index
    %41 = vector.load %arg10[%c0_41, %c224] : memref<8x256xf32, #tpu.memory_space<vmem>>, vector<1x16xf32>
    tpu.vector_store %arg10[%c0_41, %c224], %40 {strides = array<i32>} : memref<8x256xf32, #tpu.memory_space<vmem>>, vector<1x16xf32>,
    %c24 = arith.constant 24 : index
    %c0_42 = arith.constant 0 : index
    %42 = vector.load %arg9[%c24, %c0_42] : memref<104x16xf32, #tpu.memory_space<vmem>>, vector<1x16xf32>
    %c0_43 = arith.constant 0 : index
    %c240 = arith.constant 240 : index
    %43 = vector.load %arg10[%c0_43, %c240] : memref<8x256xf32, #tpu.memory_space<vmem>>, vector<1x16xf32>
    tpu.vector_store %arg10[%c0_43, %c240], %42 {strides = array<i32>} : memref<8x256xf32, #tpu.memory_space<vmem>>, vector<1x16xf32>,
    %c49 = arith.constant 49 : index
    %c0_44 = arith.constant 0 : index
    %44 = vector.load %arg9[%c49, %c0_44] : memref<104x16xf32, #tpu.memory_space<vmem>>, vector<1x16xf32>
    %c1_45 = arith.constant 1 : index
    %c0_46 = arith.constant 0 : index
    %45 = vector.load %arg10[%c1_45, %c0_46] : memref<8x256xf32, #tpu.memory_space<vmem>>, vector<1x16xf32>
    tpu.vector_store %arg10[%c1_45, %c0_46], %44 {strides = array<i32>} : memref<8x256xf32, #tpu.memory_space<vmem>>, vector<1x16xf32>,
    %c50 = arith.constant 50 : index
    %c0_47 = arith.constant 0 : index
    %46 = vector.load %arg9[%c50, %c0_47] : memref<104x16xf32, #tpu.memory_space<vmem>>, vector<1x16xf32>
    %c1_48 = arith.constant 1 : index
    %c16_49 = arith.constant 16 : index
    %47 = vector.load %arg10[%c1_48, %c16_49] : memref<8x256xf32, #tpu.memory_space<vmem>>, vector<1x16xf32>
    tpu.vector_store %arg10[%c1_48, %c16_49], %46 {strides = array<i32>} : memref<8x256xf32, #tpu.memory_space<vmem>>, vector<1x16xf32>,
    %c51 = arith.constant 51 : index
    %c0_50 = arith.constant 0 : index
    %48 = vector.load %arg9[%c51, %c0_50] : memref<104x16xf32, #tpu.memory_space<vmem>>, vector<1x16xf32>
    %c1_51 = arith.constant 1 : index
    %c32_52 = arith.constant 32 : index
    %49 = vector.load %arg10[%c1_51, %c32_52] : memref<8x256xf32, #tpu.memory_space<vmem>>, vector<1x16xf32>
    tpu.vector_store %arg10[%c1_51, %c32_52], %48 {strides = array<i32>} : memref<8x256xf32, #tpu.memory_space<vmem>>, vector<1x16xf32>,
    %c52 = arith.constant 52 : index
    %c0_53 = arith.constant 0 : index
    %50 = vector.load %arg9[%c52, %c0_53] : memref<104x16xf32, #tpu.memory_space<vmem>>, vector<1x16xf32>
    %c1_54 = arith.constant 1 : index
    %c48_55 = arith.constant 48 : index
    %51 = vector.load %arg10[%c1_54, %c48_55] : memref<8x256xf32, #tpu.memory_space<vmem>>, vector<1x16xf32>
    tpu.vector_store %arg10[%c1_54, %c48_55], %50 {strides = array<i32>} : memref<8x256xf32, #tpu.memory_space<vmem>>, vector<1x16xf32>,
    %c56 = arith.constant 56 : index
    %c0_56 = arith.constant 0 : index
    %52 = vector.load %arg9[%c56, %c0_56] : memref<104x16xf32, #tpu.memory_space<vmem>>, vector<1x16xf32>
    %c1_57 = arith.constant 1 : index
    %c64_58 = arith.constant 64 : index
    %53 = vector.load %arg10[%c1_57, %c64_58] : memref<8x256xf32, #tpu.memory_space<vmem>>, vector<1x16xf32>
    tpu.vector_store %arg10[%c1_57, %c64_58], %52 {strides = array<i32>} : memref<8x256xf32, #tpu.memory_space<vmem>>, vector<1x16xf32>,
    %c57 = arith.constant 57 : index
    %c0_59 = arith.constant 0 : index
    %54 = vector.load %arg9[%c57, %c0_59] : memref<104x16xf32, #tpu.memory_space<vmem>>, vector<1x16xf32>
    %c1_60 = arith.constant 1 : index
    %c80_61 = arith.constant 80 : index
    %55 = vector.load %arg10[%c1_60, %c80_61] : memref<8x256xf32, #tpu.memory_space<vmem>>, vector<1x16xf32>
    tpu.vector_store %arg10[%c1_60, %c80_61], %54 {strides = array<i32>} : memref<8x256xf32, #tpu.memory_space<vmem>>, vector<1x16xf32>,
    %c58 = arith.constant 58 : index
    %c0_62 = arith.constant 0 : index
    %56 = vector.load %arg9[%c58, %c0_62] : memref<104x16xf32, #tpu.memory_space<vmem>>, vector<1x16xf32>
    %c1_63 = arith.constant 1 : index
    %c96_64 = arith.constant 96 : index
    %57 = vector.load %arg10[%c1_63, %c96_64] : memref<8x256xf32, #tpu.memory_space<vmem>>, vector<1x16xf32>
    tpu.vector_store %arg10[%c1_63, %c96_64], %56 {strides = array<i32>} : memref<8x256xf32, #tpu.memory_space<vmem>>, vector<1x16xf32>,
    %c59 = arith.constant 59 : index
    %c0_65 = arith.constant 0 : index
    %58 = vector.load %arg9[%c59, %c0_65] : memref<104x16xf32, #tpu.memory_space<vmem>>, vector<1x16xf32>
    %c1_66 = arith.constant 1 : index
    %c112_67 = arith.constant 112 : index
    %59 = vector.load %arg10[%c1_66, %c112_67] : memref<8x256xf32, #tpu.memory_space<vmem>>, vector<1x16xf32>
    tpu.vector_store %arg10[%c1_66, %c112_67], %58 {strides = array<i32>} : memref<8x256xf32, #tpu.memory_space<vmem>>, vector<1x16xf32>,
    %c63 = arith.constant 63 : index
    %c0_68 = arith.constant 0 : index
    %60 = vector.load %arg9[%c63, %c0_68] : memref<104x16xf32, #tpu.memory_space<vmem>>, vector<1x16xf32>
    %c1_69 = arith.constant 1 : index
    %c128_70 = arith.constant 128 : index
    %61 = vector.load %arg10[%c1_69, %c128_70] : memref<8x256xf32, #tpu.memory_space<vmem>>, vector<1x16xf32>
    tpu.vector_store %arg10[%c1_69, %c128_70], %60 {strides = array<i32>} : memref<8x256xf32, #tpu.memory_space<vmem>>, vector<1x16xf32>,
    %c64_71 = arith.constant 64 : index
    %c0_72 = arith.constant 0 : index
    %62 = vector.load %arg9[%c64_71, %c0_72] : memref<104x16xf32, #tpu.memory_space<vmem>>, vector<1x16xf32>
    %c1_73 = arith.constant 1 : index
    %c144_74 = arith.constant 144 : index
    %63 = vector.load %arg10[%c1_73, %c144_74] : memref<8x256xf32, #tpu.memory_space<vmem>>, vector<1x16xf32>
    tpu.vector_store %arg10[%c1_73, %c144_74], %62 {strides = array<i32>} : memref<8x256xf32, #tpu.memory_space<vmem>>, vector<1x16xf32>,
    %c65 = arith.constant 65 : index
    %c0_75 = arith.constant 0 : index
    %64 = vector.load %arg9[%c65, %c0_75] : memref<104x16xf32, #tpu.memory_space<vmem>>, vector<1x16xf32>
    %c1_76 = arith.constant 1 : index
    %c160_77 = arith.constant 160 : index
    %65 = vector.load %arg10[%c1_76, %c160_77] : memref<8x256xf32, #tpu.memory_space<vmem>>, vector<1x16xf32>
    tpu.vector_store %arg10[%c1_76, %c160_77], %64 {strides = array<i32>} : memref<8x256xf32, #tpu.memory_space<vmem>>, vector<1x16xf32>,
    %c66 = arith.constant 66 : index
    %c0_78 = arith.constant 0 : index
    %66 = vector.load %arg9[%c66, %c0_78] : memref<104x16xf32, #tpu.memory_space<vmem>>, vector<1x16xf32>
    %c1_79 = arith.constant 1 : index
    %c176_80 = arith.constant 176 : index
    %67 = vector.load %arg10[%c1_79, %c176_80] : memref<8x256xf32, #tpu.memory_space<vmem>>, vector<1x16xf32>
    tpu.vector_store %arg10[%c1_79, %c176_80], %66 {strides = array<i32>} : memref<8x256xf32, #tpu.memory_space<vmem>>, vector<1x16xf32>,
    %c70 = arith.constant 70 : index
    %c0_81 = arith.constant 0 : index
    %68 = vector.load %arg9[%c70, %c0_81] : memref<104x16xf32, #tpu.memory_space<vmem>>, vector<1x16xf32>
    %c1_82 = arith.constant 1 : index
    %c192_83 = arith.constant 192 : index
    %69 = vector.load %arg10[%c1_82, %c192_83] : memref<8x256xf32, #tpu.memory_space<vmem>>, vector<1x16xf32>
    tpu.vector_store %arg10[%c1_82, %c192_83], %68 {strides = array<i32>} : memref<8x256xf32, #tpu.memory_space<vmem>>, vector<1x16xf32>,
    %c71 = arith.constant 71 : index
    %c0_84 = arith.constant 0 : index
    %70 = vector.load %arg9[%c71, %c0_84] : memref<104x16xf32, #tpu.memory_space<vmem>>, vector<1x16xf32>
    %c1_85 = arith.constant 1 : index
    %c208_86 = arith.constant 208 : index
    %71 = vector.load %arg10[%c1_85, %c208_86] : memref<8x256xf32, #tpu.memory_space<vmem>>, vector<1x16xf32>
    tpu.vector_store %arg10[%c1_85, %c208_86], %70 {strides = array<i32>} : memref<8x256xf32, #tpu.memory_space<vmem>>, vector<1x16xf32>,
    %c72 = arith.constant 72 : index
    %c0_87 = arith.constant 0 : index
    %72 = vector.load %arg9[%c72, %c0_87] : memref<104x16xf32, #tpu.memory_space<vmem>>, vector<1x16xf32>
    %c1_88 = arith.constant 1 : index
    %c224_89 = arith.constant 224 : index
    %73 = vector.load %arg10[%c1_88, %c224_89] : memref<8x256xf32, #tpu.memory_space<vmem>>, vector<1x16xf32>
    tpu.vector_store %arg10[%c1_88, %c224_89], %72 {strides = array<i32>} : memref<8x256xf32, #tpu.memory_space<vmem>>, vector<1x16xf32>,
    %c73 = arith.constant 73 : index
    %c0_90 = arith.constant 0 : index
    %74 = vector.load %arg9[%c73, %c0_90] : memref<104x16xf32, #tpu.memory_space<vmem>>, vector<1x16xf32>
    %c1_91 = arith.constant 1 : index
    %c240_92 = arith.constant 240 : index
    %75 = vector.load %arg10[%c1_91, %c240_92] : memref<8x256xf32, #tpu.memory_space<vmem>>, vector<1x16xf32>
    tpu.vector_store %arg10[%c1_91, %c240_92], %74 {strides = array<i32>} : memref<8x256xf32, #tpu.memory_space<vmem>>, vector<1x16xf32>,
    %c2_93 = arith.constant 2 : index
    %c0_94 = arith.constant 0 : index
    %76 = vector.load %arg9[%c2_93, %c0_94] : memref<104x16xf32, #tpu.memory_space<vmem>>, vector<1x16xf32>
    %c2_95 = arith.constant 2 : index
    %c0_96 = arith.constant 0 : index
    %77 = vector.load %arg10[%c2_95, %c0_96] : memref<8x256xf32, #tpu.memory_space<vmem>>, vector<1x16xf32>
    tpu.vector_store %arg10[%c2_95, %c0_96], %76 {strides = array<i32>} : memref<8x256xf32, #tpu.memory_space<vmem>>, vector<1x16xf32>,
    %c3_97 = arith.constant 3 : index
    %c0_98 = arith.constant 0 : index
    %78 = vector.load %arg9[%c3_97, %c0_98] : memref<104x16xf32, #tpu.memory_space<vmem>>, vector<1x16xf32>
    %c2_99 = arith.constant 2 : index
    %c16_100 = arith.constant 16 : index
    %79 = vector.load %arg10[%c2_99, %c16_100] : memref<8x256xf32, #tpu.memory_space<vmem>>, vector<1x16xf32>
    tpu.vector_store %arg10[%c2_99, %c16_100], %78 {strides = array<i32>} : memref<8x256xf32, #tpu.memory_space<vmem>>, vector<1x16xf32>,
    %c4 = arith.constant 4 : index
    %c0_101 = arith.constant 0 : index
    %80 = vector.load %arg9[%c4, %c0_101] : memref<104x16xf32, #tpu.memory_space<vmem>>, vector<1x16xf32>
    %c2_102 = arith.constant 2 : index
    %c32_103 = arith.constant 32 : index
    %81 = vector.load %arg10[%c2_102, %c32_103] : memref<8x256xf32, #tpu.memory_space<vmem>>, vector<1x16xf32>
    tpu.vector_store %arg10[%c2_102, %c32_103], %80 {strides = array<i32>} : memref<8x256xf32, #tpu.memory_space<vmem>>, vector<1x16xf32>,
    %c5 = arith.constant 5 : index
    %c0_104 = arith.constant 0 : index
    %82 = vector.load %arg9[%c5, %c0_104] : memref<104x16xf32, #tpu.memory_space<vmem>>, vector<1x16xf32>
    %c2_105 = arith.constant 2 : index
    %c48_106 = arith.constant 48 : index
    %83 = vector.load %arg10[%c2_105, %c48_106] : memref<8x256xf32, #tpu.memory_space<vmem>>, vector<1x16xf32>
    tpu.vector_store %arg10[%c2_105, %c48_106], %82 {strides = array<i32>} : memref<8x256xf32, #tpu.memory_space<vmem>>, vector<1x16xf32>,
    %c9_107 = arith.constant 9 : index
    %c0_108 = arith.constant 0 : index
    %84 = vector.load %arg9[%c9_107, %c0_108] : memref<104x16xf32, #tpu.memory_space<vmem>>, vector<1x16xf32>
    %c2_109 = arith.constant 2 : index
    %c64_110 = arith.constant 64 : index
    %85 = vector.load %arg10[%c2_109, %c64_110] : memref<8x256xf32, #tpu.memory_space<vmem>>, vector<1x16xf32>
    tpu.vector_store %arg10[%c2_109, %c64_110], %84 {strides = array<i32>} : memref<8x256xf32, #tpu.memory_space<vmem>>, vector<1x16xf32>,
    %c10_111 = arith.constant 10 : index
    %c0_112 = arith.constant 0 : index
    %86 = vector.load %arg9[%c10_111, %c0_112] : memref<104x16xf32, #tpu.memory_space<vmem>>, vector<1x16xf32>
    %c2_113 = arith.constant 2 : index
    %c80_114 = arith.constant 80 : index
    %87 = vector.load %arg10[%c2_113, %c80_114] : memref<8x256xf32, #tpu.memory_space<vmem>>, vector<1x16xf32>
    tpu.vector_store %arg10[%c2_113, %c80_114], %86 {strides = array<i32>} : memref<8x256xf32, #tpu.memory_space<vmem>>, vector<1x16xf32>,
    %c11 = arith.constant 11 : index
    %c0_115 = arith.constant 0 : index
    %88 = vector.load %arg9[%c11, %c0_115] : memref<104x16xf32, #tpu.memory_space<vmem>>, vector<1x16xf32>
    %c2_116 = arith.constant 2 : index
    %c96_117 = arith.constant 96 : index
    %89 = vector.load %arg10[%c2_116, %c96_117] : memref<8x256xf32, #tpu.memory_space<vmem>>, vector<1x16xf32>
    tpu.vector_store %arg10[%c2_116, %c96_117], %88 {strides = array<i32>} : memref<8x256xf32, #tpu.memory_space<vmem>>, vector<1x16xf32>,
    %c12 = arith.constant 12 : index
    %c0_118 = arith.constant 0 : index
    %90 = vector.load %arg9[%c12, %c0_118] : memref<104x16xf32, #tpu.memory_space<vmem>>, vector<1x16xf32>
    %c2_119 = arith.constant 2 : index
    %c112_120 = arith.constant 112 : index
    %91 = vector.load %arg10[%c2_119, %c112_120] : memref<8x256xf32, #tpu.memory_space<vmem>>, vector<1x16xf32>
    tpu.vector_store %arg10[%c2_119, %c112_120], %90 {strides = array<i32>} : memref<8x256xf32, #tpu.memory_space<vmem>>, vector<1x16xf32>,
    %c16_121 = arith.constant 16 : index
    %c0_122 = arith.constant 0 : index
    %92 = vector.load %arg9[%c16_121, %c0_122] : memref<104x16xf32, #tpu.memory_space<vmem>>, vector<1x16xf32>
    %c2_123 = arith.constant 2 : index
    %c128_124 = arith.constant 128 : index
    %93 = vector.load %arg10[%c2_123, %c128_124] : memref<8x256xf32, #tpu.memory_space<vmem>>, vector<1x16xf32>
    tpu.vector_store %arg10[%c2_123, %c128_124], %92 {strides = array<i32>} : memref<8x256xf32, #tpu.memory_space<vmem>>, vector<1x16xf32>,
    %c17_125 = arith.constant 17 : index
    %c0_126 = arith.constant 0 : index
    %94 = vector.load %arg9[%c17_125, %c0_126] : memref<104x16xf32, #tpu.memory_space<vmem>>, vector<1x16xf32>
    %c2_127 = arith.constant 2 : index
    %c144_128 = arith.constant 144 : index
    %95 = vector.load %arg10[%c2_127, %c144_128] : memref<8x256xf32, #tpu.memory_space<vmem>>, vector<1x16xf32>
    tpu.vector_store %arg10[%c2_127, %c144_128], %94 {strides = array<i32>} : memref<8x256xf32, #tpu.memory_space<vmem>>, vector<1x16xf32>,
    %c18 = arith.constant 18 : index
    %c0_129 = arith.constant 0 : index
    %96 = vector.load %arg9[%c18, %c0_129] : memref<104x16xf32, #tpu.memory_space<vmem>>, vector<1x16xf32>
    %c2_130 = arith.constant 2 : index
    %c160_131 = arith.constant 160 : index
    %97 = vector.load %arg10[%c2_130, %c160_131] : memref<8x256xf32, #tpu.memory_space<vmem>>, vector<1x16xf32>
    tpu.vector_store %arg10[%c2_130, %c160_131], %96 {strides = array<i32>} : memref<8x256xf32, #tpu.memory_space<vmem>>, vector<1x16xf32>,
    %c19 = arith.constant 19 : index
    %c0_132 = arith.constant 0 : index
    %98 = vector.load %arg9[%c19, %c0_132] : memref<104x16xf32, #tpu.memory_space<vmem>>, vector<1x16xf32>
    %c2_133 = arith.constant 2 : index
    %c176_134 = arith.constant 176 : index
    %99 = vector.load %arg10[%c2_133, %c176_134] : memref<8x256xf32, #tpu.memory_space<vmem>>, vector<1x16xf32>
    tpu.vector_store %arg10[%c2_133, %c176_134], %98 {strides = array<i32>} : memref<8x256xf32, #tpu.memory_space<vmem>>, vector<1x16xf32>,
    %c23_135 = arith.constant 23 : index
    %c0_136 = arith.constant 0 : index
    %100 = vector.load %arg9[%c23_135, %c0_136] : memref<104x16xf32, #tpu.memory_space<vmem>>, vector<1x16xf32>
    %c2_137 = arith.constant 2 : index
    %c192_138 = arith.constant 192 : index
    %101 = vector.load %arg10[%c2_137, %c192_138] : memref<8x256xf32, #tpu.memory_space<vmem>>, vector<1x16xf32>
    tpu.vector_store %arg10[%c2_137, %c192_138], %100 {strides = array<i32>} : memref<8x256xf32, #tpu.memory_space<vmem>>, vector<1x16xf32>,
    %c24_139 = arith.constant 24 : index
    %c0_140 = arith.constant 0 : index
    %102 = vector.load %arg9[%c24_139, %c0_140] : memref<104x16xf32, #tpu.memory_space<vmem>>, vector<1x16xf32>
    %c2_141 = arith.constant 2 : index
    %c208_142 = arith.constant 208 : index
    %103 = vector.load %arg10[%c2_141, %c208_142] : memref<8x256xf32, #tpu.memory_space<vmem>>, vector<1x16xf32>
    tpu.vector_store %arg10[%c2_141, %c208_142], %102 {strides = array<i32>} : memref<8x256xf32, #tpu.memory_space<vmem>>, vector<1x16xf32>,
    %c25 = arith.constant 25 : index
    %c0_143 = arith.constant 0 : index
    %104 = vector.load %arg9[%c25, %c0_143] : memref<104x16xf32, #tpu.memory_space<vmem>>, vector<1x16xf32>
    %c2_144 = arith.constant 2 : index
    %c224_145 = arith.constant 224 : index
    %105 = vector.load %arg10[%c2_144, %c224_145] : memref<8x256xf32, #tpu.memory_space<vmem>>, vector<1x16xf32>
    tpu.vector_store %arg10[%c2_144, %c224_145], %104 {strides = array<i32>} : memref<8x256xf32, #tpu.memory_space<vmem>>, vector<1x16xf32>,
    %c26 = arith.constant 26 : index
    %c0_146 = arith.constant 0 : index
    %106 = vector.load %arg9[%c26, %c0_146] : memref<104x16xf32, #tpu.memory_space<vmem>>, vector<1x16xf32>
    %c2_147 = arith.constant 2 : index
    %c240_148 = arith.constant 240 : index
    %107 = vector.load %arg10[%c2_147, %c240_148] : memref<8x256xf32, #tpu.memory_space<vmem>>, vector<1x16xf32>
    tpu.vector_store %arg10[%c2_147, %c240_148], %106 {strides = array<i32>} : memref<8x256xf32, #tpu.memory_space<vmem>>, vector<1x16xf32>,
    %c51_149 = arith.constant 51 : index
    %c0_150 = arith.constant 0 : index
    %108 = vector.load %arg9[%c51_149, %c0_150] : memref<104x16xf32, #tpu.memory_space<vmem>>, vector<1x16xf32>
    %c3_151 = arith.constant 3 : index
    %c0_152 = arith.constant 0 : index
    %109 = vector.load %arg10[%c3_151, %c0_152] : memref<8x256xf32, #tpu.memory_space<vmem>>, vector<1x16xf32>
    tpu.vector_store %arg10[%c3_151, %c0_152], %108 {strides = array<i32>} : memref<8x256xf32, #tpu.memory_space<vmem>>, vector<1x16xf32>,
    %c52_153 = arith.constant 52 : index
    %c0_154 = arith.constant 0 : index
    %110 = vector.load %arg9[%c52_153, %c0_154] : memref<104x16xf32, #tpu.memory_space<vmem>>, vector<1x16xf32>
    %c3_155 = arith.constant 3 : index
    %c16_156 = arith.constant 16 : index
    %111 = vector.load %arg10[%c3_155, %c16_156] : memref<8x256xf32, #tpu.memory_space<vmem>>, vector<1x16xf32>
    tpu.vector_store %arg10[%c3_155, %c16_156], %110 {strides = array<i32>} : memref<8x256xf32, #tpu.memory_space<vmem>>, vector<1x16xf32>,
    %c53 = arith.constant 53 : index
    %c0_157 = arith.constant 0 : index
    %112 = vector.load %arg9[%c53, %c0_157] : memref<104x16xf32, #tpu.memory_space<vmem>>, vector<1x16xf32>
    %c3_158 = arith.constant 3 : index
    %c32_159 = arith.constant 32 : index
    %113 = vector.load %arg10[%c3_158, %c32_159] : memref<8x256xf32, #tpu.memory_space<vmem>>, vector<1x16xf32>
    tpu.vector_store %arg10[%c3_158, %c32_159], %112 {strides = array<i32>} : memref<8x256xf32, #tpu.memory_space<vmem>>, vector<1x16xf32>,
    %c54 = arith.constant 54 : index
    %c0_160 = arith.constant 0 : index
    %114 = vector.load %arg9[%c54, %c0_160] : memref<104x16xf32, #tpu.memory_space<vmem>>, vector<1x16xf32>
    %c3_161 = arith.constant 3 : index
    %c48_162 = arith.constant 48 : index
    %115 = vector.load %arg10[%c3_161, %c48_162] : memref<8x256xf32, #tpu.memory_space<vmem>>, vector<1x16xf32>
    tpu.vector_store %arg10[%c3_161, %c48_162], %114 {strides = array<i32>} : memref<8x256xf32, #tpu.memory_space<vmem>>, vector<1x16xf32>,
    %c58_163 = arith.constant 58 : index
    %c0_164 = arith.constant 0 : index
    %116 = vector.load %arg9[%c58_163, %c0_164] : memref<104x16xf32, #tpu.memory_space<vmem>>, vector<1x16xf32>
    %c3_165 = arith.constant 3 : index
    %c64_166 = arith.constant 64 : index
    %117 = vector.load %arg10[%c3_165, %c64_166] : memref<8x256xf32, #tpu.memory_space<vmem>>, vector<1x16xf32>
    tpu.vector_store %arg10[%c3_165, %c64_166], %116 {strides = array<i32>} : memref<8x256xf32, #tpu.memory_space<vmem>>, vector<1x16xf32>,
    %c59_167 = arith.constant 59 : index
    %c0_168 = arith.constant 0 : index
    %118 = vector.load %arg9[%c59_167, %c0_168] : memref<104x16xf32, #tpu.memory_space<vmem>>, vector<1x16xf32>
    %c3_169 = arith.constant 3 : index
    %c80_170 = arith.constant 80 : index
    %119 = vector.load %arg10[%c3_169, %c80_170] : memref<8x256xf32, #tpu.memory_space<vmem>>, vector<1x16xf32>
    tpu.vector_store %arg10[%c3_169, %c80_170], %118 {strides = array<i32>} : memref<8x256xf32, #tpu.memory_space<vmem>>, vector<1x16xf32>,
    %c60 = arith.constant 60 : index
    %c0_171 = arith.constant 0 : index
    %120 = vector.load %arg9[%c60, %c0_171] : memref<104x16xf32, #tpu.memory_space<vmem>>, vector<1x16xf32>
    %c3_172 = arith.constant 3 : index
    %c96_173 = arith.constant 96 : index
    %121 = vector.load %arg10[%c3_172, %c96_173] : memref<8x256xf32, #tpu.memory_space<vmem>>, vector<1x16xf32>
    tpu.vector_store %arg10[%c3_172, %c96_173], %120 {strides = array<i32>} : memref<8x256xf32, #tpu.memory_space<vmem>>, vector<1x16xf32>,
    %c61 = arith.constant 61 : index
    %c0_174 = arith.constant 0 : index
    %122 = vector.load %arg9[%c61, %c0_174] : memref<104x16xf32, #tpu.memory_space<vmem>>, vector<1x16xf32>
    %c3_175 = arith.constant 3 : index
    %c112_176 = arith.constant 112 : index
    %123 = vector.load %arg10[%c3_175, %c112_176] : memref<8x256xf32, #tpu.memory_space<vmem>>, vector<1x16xf32>
    tpu.vector_store %arg10[%c3_175, %c112_176], %122 {strides = array<i32>} : memref<8x256xf32, #tpu.memory_space<vmem>>, vector<1x16xf32>,
    %c65_177 = arith.constant 65 : index
    %c0_178 = arith.constant 0 : index
    %124 = vector.load %arg9[%c65_177, %c0_178] : memref<104x16xf32, #tpu.memory_space<vmem>>, vector<1x16xf32>
    %c3_179 = arith.constant 3 : index
    %c128_180 = arith.constant 128 : index
    %125 = vector.load %arg10[%c3_179, %c128_180] : memref<8x256xf32, #tpu.memory_space<vmem>>, vector<1x16xf32>
    tpu.vector_store %arg10[%c3_179, %c128_180], %124 {strides = array<i32>} : memref<8x256xf32, #tpu.memory_space<vmem>>, vector<1x16xf32>,
    %c66_181 = arith.constant 66 : index
    %c0_182 = arith.constant 0 : index
    %126 = vector.load %arg9[%c66_181, %c0_182] : memref<104x16xf32, #tpu.memory_space<vmem>>, vector<1x16xf32>
    %c3_183 = arith.constant 3 : index
    %c144_184 = arith.constant 144 : index
    %127 = vector.load %arg10[%c3_183, %c144_184] : memref<8x256xf32, #tpu.memory_space<vmem>>, vector<1x16xf32>
    tpu.vector_store %arg10[%c3_183, %c144_184], %126 {strides = array<i32>} : memref<8x256xf32, #tpu.memory_space<vmem>>, vector<1x16xf32>,
    %c67 = arith.constant 67 : index
    %c0_185 = arith.constant 0 : index
    %128 = vector.load %arg9[%c67, %c0_185] : memref<104x16xf32, #tpu.memory_space<vmem>>, vector<1x16xf32>
    %c3_186 = arith.constant 3 : index
    %c160_187 = arith.constant 160 : index
    %129 = vector.load %arg10[%c3_186, %c160_187] : memref<8x256xf32, #tpu.memory_space<vmem>>, vector<1x16xf32>
    tpu.vector_store %arg10[%c3_186, %c160_187], %128 {strides = array<i32>} : memref<8x256xf32, #tpu.memory_space<vmem>>, vector<1x16xf32>,
    %c68 = arith.constant 68 : index
    %c0_188 = arith.constant 0 : index
    %130 = vector.load %arg9[%c68, %c0_188] : memref<104x16xf32, #tpu.memory_space<vmem>>, vector<1x16xf32>
    %c3_189 = arith.constant 3 : index
    %c176_190 = arith.constant 176 : index
    %131 = vector.load %arg10[%c3_189, %c176_190] : memref<8x256xf32, #tpu.memory_space<vmem>>, vector<1x16xf32>
    tpu.vector_store %arg10[%c3_189, %c176_190], %130 {strides = array<i32>} : memref<8x256xf32, #tpu.memory_space<vmem>>, vector<1x16xf32>,
    %c72_191 = arith.constant 72 : index
    %c0_192 = arith.constant 0 : index
    %132 = vector.load %arg9[%c72_191, %c0_192] : memref<104x16xf32, #tpu.memory_space<vmem>>, vector<1x16xf32>
    %c3_193 = arith.constant 3 : index
    %c192_194 = arith.constant 192 : index
    %133 = vector.load %arg10[%c3_193, %c192_194] : memref<8x256xf32, #tpu.memory_space<vmem>>, vector<1x16xf32>
    tpu.vector_store %arg10[%c3_193, %c192_194], %132 {strides = array<i32>} : memref<8x256xf32, #tpu.memory_space<vmem>>, vector<1x16xf32>,
    %c73_195 = arith.constant 73 : index
    %c0_196 = arith.constant 0 : index
    %134 = vector.load %arg9[%c73_195, %c0_196] : memref<104x16xf32, #tpu.memory_space<vmem>>, vector<1x16xf32>
    %c3_197 = arith.constant 3 : index
    %c208_198 = arith.constant 208 : index
    %135 = vector.load %arg10[%c3_197, %c208_198] : memref<8x256xf32, #tpu.memory_space<vmem>>, vector<1x16xf32>
    tpu.vector_store %arg10[%c3_197, %c208_198], %134 {strides = array<i32>} : memref<8x256xf32, #tpu.memory_space<vmem>>, vector<1x16xf32>,
    %c74 = arith.constant 74 : index
    %c0_199 = arith.constant 0 : index
    %136 = vector.load %arg9[%c74, %c0_199] : memref<104x16xf32, #tpu.memory_space<vmem>>, vector<1x16xf32>
    %c3_200 = arith.constant 3 : index
    %c224_201 = arith.constant 224 : index
    %137 = vector.load %arg10[%c3_200, %c224_201] : memref<8x256xf32, #tpu.memory_space<vmem>>, vector<1x16xf32>
    tpu.vector_store %arg10[%c3_200, %c224_201], %136 {strides = array<i32>} : memref<8x256xf32, #tpu.memory_space<vmem>>, vector<1x16xf32>,
    %c75 = arith.constant 75 : index
    %c0_202 = arith.constant 0 : index
    %138 = vector.load %arg9[%c75, %c0_202] : memref<104x16xf32, #tpu.memory_space<vmem>>, vector<1x16xf32>
    %c3_203 = arith.constant 3 : index
    %c240_204 = arith.constant 240 : index
    %139 = vector.load %arg10[%c3_203, %c240_204] : memref<8x256xf32, #tpu.memory_space<vmem>>, vector<1x16xf32>
    tpu.vector_store %arg10[%c3_203, %c240_204], %138 {strides = array<i32>} : memref<8x256xf32, #tpu.memory_space<vmem>>, vector<1x16xf32>,
    %c14_205 = arith.constant 14 : index
    %c0_206 = arith.constant 0 : index
    %140 = vector.load %arg9[%c14_205, %c0_206] : memref<104x16xf32, #tpu.memory_space<vmem>>, vector<1x16xf32>
    %c4_207 = arith.constant 4 : index
    %c0_208 = arith.constant 0 : index
    %141 = vector.load %arg10[%c4_207, %c0_208] : memref<8x256xf32, #tpu.memory_space<vmem>>, vector<1x16xf32>
    tpu.vector_store %arg10[%c4_207, %c0_208], %140 {strides = array<i32>} : memref<8x256xf32, #tpu.memory_space<vmem>>, vector<1x16xf32>,
    %c15_209 = arith.constant 15 : index
    %c0_210 = arith.constant 0 : index
    %142 = vector.load %arg9[%c15_209, %c0_210] : memref<104x16xf32, #tpu.memory_space<vmem>>, vector<1x16xf32>
    %c4_211 = arith.constant 4 : index
    %c16_212 = arith.constant 16 : index
    %143 = vector.load %arg10[%c4_211, %c16_212] : memref<8x256xf32, #tpu.memory_space<vmem>>, vector<1x16xf32>
    tpu.vector_store %arg10[%c4_211, %c16_212], %142 {strides = array<i32>} : memref<8x256xf32, #tpu.memory_space<vmem>>, vector<1x16xf32>,
    %c16_213 = arith.constant 16 : index
    %c0_214 = arith.constant 0 : index
    %144 = vector.load %arg9[%c16_213, %c0_214] : memref<104x16xf32, #tpu.memory_space<vmem>>, vector<1x16xf32>
    %c4_215 = arith.constant 4 : index
    %c32_216 = arith.constant 32 : index
    %145 = vector.load %arg10[%c4_215, %c32_216] : memref<8x256xf32, #tpu.memory_space<vmem>>, vector<1x16xf32>
    tpu.vector_store %arg10[%c4_215, %c32_216], %144 {strides = array<i32>} : memref<8x256xf32, #tpu.memory_space<vmem>>, vector<1x16xf32>,
    %c17_217 = arith.constant 17 : index
    %c0_218 = arith.constant 0 : index
    %146 = vector.load %arg9[%c17_217, %c0_218] : memref<104x16xf32, #tpu.memory_space<vmem>>, vector<1x16xf32>
    %c4_219 = arith.constant 4 : index
    %c48_220 = arith.constant 48 : index
    %147 = vector.load %arg10[%c4_219, %c48_220] : memref<8x256xf32, #tpu.memory_space<vmem>>, vector<1x16xf32>
    tpu.vector_store %arg10[%c4_219, %c48_220], %146 {strides = array<i32>} : memref<8x256xf32, #tpu.memory_space<vmem>>, vector<1x16xf32>,
    %c21_221 = arith.constant 21 : index
    %c0_222 = arith.constant 0 : index
    %148 = vector.load %arg9[%c21_221, %c0_222] : memref<104x16xf32, #tpu.memory_space<vmem>>, vector<1x16xf32>
    %c4_223 = arith.constant 4 : index
    %c64_224 = arith.constant 64 : index
    %149 = vector.load %arg10[%c4_223, %c64_224] : memref<8x256xf32, #tpu.memory_space<vmem>>, vector<1x16xf32>
    tpu.vector_store %arg10[%c4_223, %c64_224], %148 {strides = array<i32>} : memref<8x256xf32, #tpu.memory_space<vmem>>, vector<1x16xf32>,
    %c22_225 = arith.constant 22 : index
    %c0_226 = arith.constant 0 : index
    %150 = vector.load %arg9[%c22_225, %c0_226] : memref<104x16xf32, #tpu.memory_space<vmem>>, vector<1x16xf32>
    %c4_227 = arith.constant 4 : index
    %c80_228 = arith.constant 80 : index
    %151 = vector.load %arg10[%c4_227, %c80_228] : memref<8x256xf32, #tpu.memory_space<vmem>>, vector<1x16xf32>
    tpu.vector_store %arg10[%c4_227, %c80_228], %150 {strides = array<i32>} : memref<8x256xf32, #tpu.memory_space<vmem>>, vector<1x16xf32>,
    %c23_229 = arith.constant 23 : index
    %c0_230 = arith.constant 0 : index
    %152 = vector.load %arg9[%c23_229, %c0_230] : memref<104x16xf32, #tpu.memory_space<vmem>>, vector<1x16xf32>
    %c4_231 = arith.constant 4 : index
    %c96_232 = arith.constant 96 : index
    %153 = vector.load %arg10[%c4_231, %c96_232] : memref<8x256xf32, #tpu.memory_space<vmem>>, vector<1x16xf32>
    tpu.vector_store %arg10[%c4_231, %c96_232], %152 {strides = array<i32>} : memref<8x256xf32, #tpu.memory_space<vmem>>, vector<1x16xf32>,
    %c24_233 = arith.constant 24 : index
    %c0_234 = arith.constant 0 : index
    %154 = vector.load %arg9[%c24_233, %c0_234] : memref<104x16xf32, #tpu.memory_space<vmem>>, vector<1x16xf32>
    %c4_235 = arith.constant 4 : index
    %c112_236 = arith.constant 112 : index
    %155 = vector.load %arg10[%c4_235, %c112_236] : memref<8x256xf32, #tpu.memory_space<vmem>>, vector<1x16xf32>
    tpu.vector_store %arg10[%c4_235, %c112_236], %154 {strides = array<i32>} : memref<8x256xf32, #tpu.memory_space<vmem>>, vector<1x16xf32>,
    %c28 = arith.constant 28 : index
    %c0_237 = arith.constant 0 : index
    %156 = vector.load %arg9[%c28, %c0_237] : memref<104x16xf32, #tpu.memory_space<vmem>>, vector<1x16xf32>
    %c4_238 = arith.constant 4 : index
    %c128_239 = arith.constant 128 : index
    %157 = vector.load %arg10[%c4_238, %c128_239] : memref<8x256xf32, #tpu.memory_space<vmem>>, vector<1x16xf32>
    tpu.vector_store %arg10[%c4_238, %c128_239], %156 {strides = array<i32>} : memref<8x256xf32, #tpu.memory_space<vmem>>, vector<1x16xf32>,
    %c29 = arith.constant 29 : index
    %c0_240 = arith.constant 0 : index
    %158 = vector.load %arg9[%c29, %c0_240] : memref<104x16xf32, #tpu.memory_space<vmem>>, vector<1x16xf32>
    %c4_241 = arith.constant 4 : index
    %c144_242 = arith.constant 144 : index
    %159 = vector.load %arg10[%c4_241, %c144_242] : memref<8x256xf32, #tpu.memory_space<vmem>>, vector<1x16xf32>
    tpu.vector_store %arg10[%c4_241, %c144_242], %158 {strides = array<i32>} : memref<8x256xf32, #tpu.memory_space<vmem>>, vector<1x16xf32>,
    %c30 = arith.constant 30 : index
    %c0_243 = arith.constant 0 : index
    %160 = vector.load %arg9[%c30, %c0_243] : memref<104x16xf32, #tpu.memory_space<vmem>>, vector<1x16xf32>
    %c4_244 = arith.constant 4 : index
    %c160_245 = arith.constant 160 : index
    %161 = vector.load %arg10[%c4_244, %c160_245] : memref<8x256xf32, #tpu.memory_space<vmem>>, vector<1x16xf32>
    tpu.vector_store %arg10[%c4_244, %c160_245], %160 {strides = array<i32>} : memref<8x256xf32, #tpu.memory_space<vmem>>, vector<1x16xf32>,
    %c31 = arith.constant 31 : index
    %c0_246 = arith.constant 0 : index
    %162 = vector.load %arg9[%c31, %c0_246] : memref<104x16xf32, #tpu.memory_space<vmem>>, vector<1x16xf32>
    %c4_247 = arith.constant 4 : index
    %c176_248 = arith.constant 176 : index
    %163 = vector.load %arg10[%c4_247, %c176_248] : memref<8x256xf32, #tpu.memory_space<vmem>>, vector<1x16xf32>
    tpu.vector_store %arg10[%c4_247, %c176_248], %162 {strides = array<i32>} : memref<8x256xf32, #tpu.memory_space<vmem>>, vector<1x16xf32>,
    %c35 = arith.constant 35 : index
    %c0_249 = arith.constant 0 : index
    %164 = vector.load %arg9[%c35, %c0_249] : memref<104x16xf32, #tpu.memory_space<vmem>>, vector<1x16xf32>
    %c4_250 = arith.constant 4 : index
    %c192_251 = arith.constant 192 : index
    %165 = vector.load %arg10[%c4_250, %c192_251] : memref<8x256xf32, #tpu.memory_space<vmem>>, vector<1x16xf32>
    tpu.vector_store %arg10[%c4_250, %c192_251], %164 {strides = array<i32>} : memref<8x256xf32, #tpu.memory_space<vmem>>, vector<1x16xf32>,
    %c36 = arith.constant 36 : index
    %c0_252 = arith.constant 0 : index
    %166 = vector.load %arg9[%c36, %c0_252] : memref<104x16xf32, #tpu.memory_space<vmem>>, vector<1x16xf32>
    %c4_253 = arith.constant 4 : index
    %c208_254 = arith.constant 208 : index
    %167 = vector.load %arg10[%c4_253, %c208_254] : memref<8x256xf32, #tpu.memory_space<vmem>>, vector<1x16xf32>
    tpu.vector_store %arg10[%c4_253, %c208_254], %166 {strides = array<i32>} : memref<8x256xf32, #tpu.memory_space<vmem>>, vector<1x16xf32>,
    %c37 = arith.constant 37 : index
    %c0_255 = arith.constant 0 : index
    %168 = vector.load %arg9[%c37, %c0_255] : memref<104x16xf32, #tpu.memory_space<vmem>>, vector<1x16xf32>
    %c4_256 = arith.constant 4 : index
    %c224_257 = arith.constant 224 : index
    %169 = vector.load %arg10[%c4_256, %c224_257] : memref<8x256xf32, #tpu.memory_space<vmem>>, vector<1x16xf32>
    tpu.vector_store %arg10[%c4_256, %c224_257], %168 {strides = array<i32>} : memref<8x256xf32, #tpu.memory_space<vmem>>, vector<1x16xf32>,
    %c38 = arith.constant 38 : index
    %c0_258 = arith.constant 0 : index
    %170 = vector.load %arg9[%c38, %c0_258] : memref<104x16xf32, #tpu.memory_space<vmem>>, vector<1x16xf32>
    %c4_259 = arith.constant 4 : index
    %c240_260 = arith.constant 240 : index
    %171 = vector.load %arg10[%c4_259, %c240_260] : memref<8x256xf32, #tpu.memory_space<vmem>>, vector<1x16xf32>
    tpu.vector_store %arg10[%c4_259, %c240_260], %170 {strides = array<i32>} : memref<8x256xf32, #tpu.memory_space<vmem>>, vector<1x16xf32>,
    %c63_261 = arith.constant 63 : index
    %c0_262 = arith.constant 0 : index
    %172 = vector.load %arg9[%c63_261, %c0_262] : memref<104x16xf32, #tpu.memory_space<vmem>>, vector<1x16xf32>
    %c5_263 = arith.constant 5 : index
    %c0_264 = arith.constant 0 : index
    %173 = vector.load %arg10[%c5_263, %c0_264] : memref<8x256xf32, #tpu.memory_space<vmem>>, vector<1x16xf32>
    tpu.vector_store %arg10[%c5_263, %c0_264], %172 {strides = array<i32>} : memref<8x256xf32, #tpu.memory_space<vmem>>, vector<1x16xf32>,
    %c64_265 = arith.constant 64 : index
    %c0_266 = arith.constant 0 : index
    %174 = vector.load %arg9[%c64_265, %c0_266] : memref<104x16xf32, #tpu.memory_space<vmem>>, vector<1x16xf32>
    %c5_267 = arith.constant 5 : index
    %c16_268 = arith.constant 16 : index
    %175 = vector.load %arg10[%c5_267, %c16_268] : memref<8x256xf32, #tpu.memory_space<vmem>>, vector<1x16xf32>
    tpu.vector_store %arg10[%c5_267, %c16_268], %174 {strides = array<i32>} : memref<8x256xf32, #tpu.memory_space<vmem>>, vector<1x16xf32>,
    %c65_269 = arith.constant 65 : index
    %c0_270 = arith.constant 0 : index
    %176 = vector.load %arg9[%c65_269, %c0_270] : memref<104x16xf32, #tpu.memory_space<vmem>>, vector<1x16xf32>
    %c5_271 = arith.constant 5 : index
    %c32_272 = arith.constant 32 : index
    %177 = vector.load %arg10[%c5_271, %c32_272] : memref<8x256xf32, #tpu.memory_space<vmem>>, vector<1x16xf32>
    tpu.vector_store %arg10[%c5_271, %c32_272], %176 {strides = array<i32>} : memref<8x256xf32, #tpu.memory_space<vmem>>, vector<1x16xf32>,
    %c66_273 = arith.constant 66 : index
    %c0_274 = arith.constant 0 : index
    %178 = vector.load %arg9[%c66_273, %c0_274] : memref<104x16xf32, #tpu.memory_space<vmem>>, vector<1x16xf32>
    %c5_275 = arith.constant 5 : index
    %c48_276 = arith.constant 48 : index
    %179 = vector.load %arg10[%c5_275, %c48_276] : memref<8x256xf32, #tpu.memory_space<vmem>>, vector<1x16xf32>
    tpu.vector_store %arg10[%c5_275, %c48_276], %178 {strides = array<i32>} : memref<8x256xf32, #tpu.memory_space<vmem>>, vector<1x16xf32>,
    %c70_277 = arith.constant 70 : index
    %c0_278 = arith.constant 0 : index
    %180 = vector.load %arg9[%c70_277, %c0_278] : memref<104x16xf32, #tpu.memory_space<vmem>>, vector<1x16xf32>
    %c5_279 = arith.constant 5 : index
    %c64_280 = arith.constant 64 : index
    %181 = vector.load %arg10[%c5_279, %c64_280] : memref<8x256xf32, #tpu.memory_space<vmem>>, vector<1x16xf32>
    tpu.vector_store %arg10[%c5_279, %c64_280], %180 {strides = array<i32>} : memref<8x256xf32, #tpu.memory_space<vmem>>, vector<1x16xf32>,
    %c71_281 = arith.constant 71 : index
    %c0_282 = arith.constant 0 : index
    %182 = vector.load %arg9[%c71_281, %c0_282] : memref<104x16xf32, #tpu.memory_space<vmem>>, vector<1x16xf32>
    %c5_283 = arith.constant 5 : index
    %c80_284 = arith.constant 80 : index
    %183 = vector.load %arg10[%c5_283, %c80_284] : memref<8x256xf32, #tpu.memory_space<vmem>>, vector<1x16xf32>
    tpu.vector_store %arg10[%c5_283, %c80_284], %182 {strides = array<i32>} : memref<8x256xf32, #tpu.memory_space<vmem>>, vector<1x16xf32>,
    %c72_285 = arith.constant 72 : index
    %c0_286 = arith.constant 0 : index
    %184 = vector.load %arg9[%c72_285, %c0_286] : memref<104x16xf32, #tpu.memory_space<vmem>>, vector<1x16xf32>
    %c5_287 = arith.constant 5 : index
    %c96_288 = arith.constant 96 : index
    %185 = vector.load %arg10[%c5_287, %c96_288] : memref<8x256xf32, #tpu.memory_space<vmem>>, vector<1x16xf32>
    tpu.vector_store %arg10[%c5_287, %c96_288], %184 {strides = array<i32>} : memref<8x256xf32, #tpu.memory_space<vmem>>, vector<1x16xf32>,
    %c73_289 = arith.constant 73 : index
    %c0_290 = arith.constant 0 : index
    %186 = vector.load %arg9[%c73_289, %c0_290] : memref<104x16xf32, #tpu.memory_space<vmem>>, vector<1x16xf32>
    %c5_291 = arith.constant 5 : index
    %c112_292 = arith.constant 112 : index
    %187 = vector.load %arg10[%c5_291, %c112_292] : memref<8x256xf32, #tpu.memory_space<vmem>>, vector<1x16xf32>
    tpu.vector_store %arg10[%c5_291, %c112_292], %186 {strides = array<i32>} : memref<8x256xf32, #tpu.memory_space<vmem>>, vector<1x16xf32>,
    %c77 = arith.constant 77 : index
    %c0_293 = arith.constant 0 : index
    %188 = vector.load %arg9[%c77, %c0_293] : memref<104x16xf32, #tpu.memory_space<vmem>>, vector<1x16xf32>
    %c5_294 = arith.constant 5 : index
    %c128_295 = arith.constant 128 : index
    %189 = vector.load %arg10[%c5_294, %c128_295] : memref<8x256xf32, #tpu.memory_space<vmem>>, vector<1x16xf32>
    tpu.vector_store %arg10[%c5_294, %c128_295], %188 {strides = array<i32>} : memref<8x256xf32, #tpu.memory_space<vmem>>, vector<1x16xf32>,
    %c78 = arith.constant 78 : index
    %c0_296 = arith.constant 0 : index
    %190 = vector.load %arg9[%c78, %c0_296] : memref<104x16xf32, #tpu.memory_space<vmem>>, vector<1x16xf32>
    %c5_297 = arith.constant 5 : index
    %c144_298 = arith.constant 144 : index
    %191 = vector.load %arg10[%c5_297, %c144_298] : memref<8x256xf32, #tpu.memory_space<vmem>>, vector<1x16xf32>
    tpu.vector_store %arg10[%c5_297, %c144_298], %190 {strides = array<i32>} : memref<8x256xf32, #tpu.memory_space<vmem>>, vector<1x16xf32>,
    %c79 = arith.constant 79 : index
    %c0_299 = arith.constant 0 : index
    %192 = vector.load %arg9[%c79, %c0_299] : memref<104x16xf32, #tpu.memory_space<vmem>>, vector<1x16xf32>
    %c5_300 = arith.constant 5 : index
    %c160_301 = arith.constant 160 : index
    %193 = vector.load %arg10[%c5_300, %c160_301] : memref<8x256xf32, #tpu.memory_space<vmem>>, vector<1x16xf32>
    tpu.vector_store %arg10[%c5_300, %c160_301], %192 {strides = array<i32>} : memref<8x256xf32, #tpu.memory_space<vmem>>, vector<1x16xf32>,
    %c80_302 = arith.constant 80 : index
    %c0_303 = arith.constant 0 : index
    %194 = vector.load %arg9[%c80_302, %c0_303] : memref<104x16xf32, #tpu.memory_space<vmem>>, vector<1x16xf32>
    %c5_304 = arith.constant 5 : index
    %c176_305 = arith.constant 176 : index
    %195 = vector.load %arg10[%c5_304, %c176_305] : memref<8x256xf32, #tpu.memory_space<vmem>>, vector<1x16xf32>
    tpu.vector_store %arg10[%c5_304, %c176_305], %194 {strides = array<i32>} : memref<8x256xf32, #tpu.memory_space<vmem>>, vector<1x16xf32>,
    %c84 = arith.constant 84 : index
    %c0_306 = arith.constant 0 : index
    %196 = vector.load %arg9[%c84, %c0_306] : memref<104x16xf32, #tpu.memory_space<vmem>>, vector<1x16xf32>
    %c5_307 = arith.constant 5 : index
    %c192_308 = arith.constant 192 : index
    %197 = vector.load %arg10[%c5_307, %c192_308] : memref<8x256xf32, #tpu.memory_space<vmem>>, vector<1x16xf32>
    tpu.vector_store %arg10[%c5_307, %c192_308], %196 {strides = array<i32>} : memref<8x256xf32, #tpu.memory_space<vmem>>, vector<1x16xf32>,
    %c85 = arith.constant 85 : index
    %c0_309 = arith.constant 0 : index
    %198 = vector.load %arg9[%c85, %c0_309] : memref<104x16xf32, #tpu.memory_space<vmem>>, vector<1x16xf32>
    %c5_310 = arith.constant 5 : index
    %c208_311 = arith.constant 208 : index
    %199 = vector.load %arg10[%c5_310, %c208_311] : memref<8x256xf32, #tpu.memory_space<vmem>>, vector<1x16xf32>
    tpu.vector_store %arg10[%c5_310, %c208_311], %198 {strides = array<i32>} : memref<8x256xf32, #tpu.memory_space<vmem>>, vector<1x16xf32>,
    %c86 = arith.constant 86 : index
    %c0_312 = arith.constant 0 : index
    %200 = vector.load %arg9[%c86, %c0_312] : memref<104x16xf32, #tpu.memory_space<vmem>>, vector<1x16xf32>
    %c5_313 = arith.constant 5 : index
    %c224_314 = arith.constant 224 : index
    %201 = vector.load %arg10[%c5_313, %c224_314] : memref<8x256xf32, #tpu.memory_space<vmem>>, vector<1x16xf32>
    tpu.vector_store %arg10[%c5_313, %c224_314], %200 {strides = array<i32>} : memref<8x256xf32, #tpu.memory_space<vmem>>, vector<1x16xf32>,
    %c87 = arith.constant 87 : index
    %c0_315 = arith.constant 0 : index
    %202 = vector.load %arg9[%c87, %c0_315] : memref<104x16xf32, #tpu.memory_space<vmem>>, vector<1x16xf32>
    %c5_316 = arith.constant 5 : index
    %c240_317 = arith.constant 240 : index
    %203 = vector.load %arg10[%c5_316, %c240_317] : memref<8x256xf32, #tpu.memory_space<vmem>>, vector<1x16xf32>
    tpu.vector_store %arg10[%c5_316, %c240_317], %202 {strides = array<i32>} : memref<8x256xf32, #tpu.memory_space<vmem>>, vector<1x16xf32>,
    %c16_318 = arith.constant 16 : index
    %c0_319 = arith.constant 0 : index
    %204 = vector.load %arg9[%c16_318, %c0_319] : memref<104x16xf32, #tpu.memory_space<vmem>>, vector<1x16xf32>
    %c6 = arith.constant 6 : index
    %c0_320 = arith.constant 0 : index
    %205 = vector.load %arg10[%c6, %c0_320] : memref<8x256xf32, #tpu.memory_space<vmem>>, vector<1x16xf32>
    tpu.vector_store %arg10[%c6, %c0_320], %204 {strides = array<i32>} : memref<8x256xf32, #tpu.memory_space<vmem>>, vector<1x16xf32>,
    %c17_321 = arith.constant 17 : index
    %c0_322 = arith.constant 0 : index
    %206 = vector.load %arg9[%c17_321, %c0_322] : memref<104x16xf32, #tpu.memory_space<vmem>>, vector<1x16xf32>
    %c6_323 = arith.constant 6 : index
    %c16_324 = arith.constant 16 : index
    %207 = vector.load %arg10[%c6_323, %c16_324] : memref<8x256xf32, #tpu.memory_space<vmem>>, vector<1x16xf32>
    tpu.vector_store %arg10[%c6_323, %c16_324], %206 {strides = array<i32>} : memref<8x256xf32, #tpu.memory_space<vmem>>, vector<1x16xf32>,
    %c18_325 = arith.constant 18 : index
    %c0_326 = arith.constant 0 : index
    %208 = vector.load %arg9[%c18_325, %c0_326] : memref<104x16xf32, #tpu.memory_space<vmem>>, vector<1x16xf32>
    %c6_327 = arith.constant 6 : index
    %c32_328 = arith.constant 32 : index
    %209 = vector.load %arg10[%c6_327, %c32_328] : memref<8x256xf32, #tpu.memory_space<vmem>>, vector<1x16xf32>
    tpu.vector_store %arg10[%c6_327, %c32_328], %208 {strides = array<i32>} : memref<8x256xf32, #tpu.memory_space<vmem>>, vector<1x16xf32>,
    %c19_329 = arith.constant 19 : index
    %c0_330 = arith.constant 0 : index
    %210 = vector.load %arg9[%c19_329, %c0_330] : memref<104x16xf32, #tpu.memory_space<vmem>>, vector<1x16xf32>
    %c6_331 = arith.constant 6 : index
    %c48_332 = arith.constant 48 : index
    %211 = vector.load %arg10[%c6_331, %c48_332] : memref<8x256xf32, #tpu.memory_space<vmem>>, vector<1x16xf32>
    tpu.vector_store %arg10[%c6_331, %c48_332], %210 {strides = array<i32>} : memref<8x256xf32, #tpu.memory_space<vmem>>, vector<1x16xf32>,
    %c23_333 = arith.constant 23 : index
    %c0_334 = arith.constant 0 : index
    %212 = vector.load %arg9[%c23_333, %c0_334] : memref<104x16xf32, #tpu.memory_space<vmem>>, vector<1x16xf32>
    %c6_335 = arith.constant 6 : index
    %c64_336 = arith.constant 64 : index
    %213 = vector.load %arg10[%c6_335, %c64_336] : memref<8x256xf32, #tpu.memory_space<vmem>>, vector<1x16xf32>
    tpu.vector_store %arg10[%c6_335, %c64_336], %212 {strides = array<i32>} : memref<8x256xf32, #tpu.memory_space<vmem>>, vector<1x16xf32>,
    %c24_337 = arith.constant 24 : index
    %c0_338 = arith.constant 0 : index
    %214 = vector.load %arg9[%c24_337, %c0_338] : memref<104x16xf32, #tpu.memory_space<vmem>>, vector<1x16xf32>
    %c6_339 = arith.constant 6 : index
    %c80_340 = arith.constant 80 : index
    %215 = vector.load %arg10[%c6_339, %c80_340] : memref<8x256xf32, #tpu.memory_space<vmem>>, vector<1x16xf32>
    tpu.vector_store %arg10[%c6_339, %c80_340], %214 {strides = array<i32>} : memref<8x256xf32, #tpu.memory_space<vmem>>, vector<1x16xf32>,
    %c25_341 = arith.constant 25 : index
    %c0_342 = arith.constant 0 : index
    %216 = vector.load %arg9[%c25_341, %c0_342] : memref<104x16xf32, #tpu.memory_space<vmem>>, vector<1x16xf32>
    %c6_343 = arith.constant 6 : index
    %c96_344 = arith.constant 96 : index
    %217 = vector.load %arg10[%c6_343, %c96_344] : memref<8x256xf32, #tpu.memory_space<vmem>>, vector<1x16xf32>
    tpu.vector_store %arg10[%c6_343, %c96_344], %216 {strides = array<i32>} : memref<8x256xf32, #tpu.memory_space<vmem>>, vector<1x16xf32>,
    %c26_345 = arith.constant 26 : index
    %c0_346 = arith.constant 0 : index
    %218 = vector.load %arg9[%c26_345, %c0_346] : memref<104x16xf32, #tpu.memory_space<vmem>>, vector<1x16xf32>
    %c6_347 = arith.constant 6 : index
    %c112_348 = arith.constant 112 : index
    %219 = vector.load %arg10[%c6_347, %c112_348] : memref<8x256xf32, #tpu.memory_space<vmem>>, vector<1x16xf32>
    tpu.vector_store %arg10[%c6_347, %c112_348], %218 {strides = array<i32>} : memref<8x256xf32, #tpu.memory_space<vmem>>, vector<1x16xf32>,
    %c30_349 = arith.constant 30 : index
    %c0_350 = arith.constant 0 : index
    %220 = vector.load %arg9[%c30_349, %c0_350] : memref<104x16xf32, #tpu.memory_space<vmem>>, vector<1x16xf32>
    %c6_351 = arith.constant 6 : index
    %c128_352 = arith.constant 128 : index
    %221 = vector.load %arg10[%c6_351, %c128_352] : memref<8x256xf32, #tpu.memory_space<vmem>>, vector<1x16xf32>
    tpu.vector_store %arg10[%c6_351, %c128_352], %220 {strides = array<i32>} : memref<8x256xf32, #tpu.memory_space<vmem>>, vector<1x16xf32>,
    %c31_353 = arith.constant 31 : index
    %c0_354 = arith.constant 0 : index
    %222 = vector.load %arg9[%c31_353, %c0_354] : memref<104x16xf32, #tpu.memory_space<vmem>>, vector<1x16xf32>
    %c6_355 = arith.constant 6 : index
    %c144_356 = arith.constant 144 : index
    %223 = vector.load %arg10[%c6_355, %c144_356] : memref<8x256xf32, #tpu.memory_space<vmem>>, vector<1x16xf32>
    tpu.vector_store %arg10[%c6_355, %c144_356], %222 {strides = array<i32>} : memref<8x256xf32, #tpu.memory_space<vmem>>, vector<1x16xf32>,
    %c32_357 = arith.constant 32 : index
    %c0_358 = arith.constant 0 : index
    %224 = vector.load %arg9[%c32_357, %c0_358] : memref<104x16xf32, #tpu.memory_space<vmem>>, vector<1x16xf32>
    %c6_359 = arith.constant 6 : index
    %c160_360 = arith.constant 160 : index
    %225 = vector.load %arg10[%c6_359, %c160_360] : memref<8x256xf32, #tpu.memory_space<vmem>>, vector<1x16xf32>
    tpu.vector_store %arg10[%c6_359, %c160_360], %224 {strides = array<i32>} : memref<8x256xf32, #tpu.memory_space<vmem>>, vector<1x16xf32>,
    %c33 = arith.constant 33 : index
    %c0_361 = arith.constant 0 : index
    %226 = vector.load %arg9[%c33, %c0_361] : memref<104x16xf32, #tpu.memory_space<vmem>>, vector<1x16xf32>
    %c6_362 = arith.constant 6 : index
    %c176_363 = arith.constant 176 : index
    %227 = vector.load %arg10[%c6_362, %c176_363] : memref<8x256xf32, #tpu.memory_space<vmem>>, vector<1x16xf32>
    tpu.vector_store %arg10[%c6_362, %c176_363], %226 {strides = array<i32>} : memref<8x256xf32, #tpu.memory_space<vmem>>, vector<1x16xf32>,
    %c37_364 = arith.constant 37 : index
    %c0_365 = arith.constant 0 : index
    %228 = vector.load %arg9[%c37_364, %c0_365] : memref<104x16xf32, #tpu.memory_space<vmem>>, vector<1x16xf32>
    %c6_366 = arith.constant 6 : index
    %c192_367 = arith.constant 192 : index
    %229 = vector.load %arg10[%c6_366, %c192_367] : memref<8x256xf32, #tpu.memory_space<vmem>>, vector<1x16xf32>
    tpu.vector_store %arg10[%c6_366, %c192_367], %228 {strides = array<i32>} : memref<8x256xf32, #tpu.memory_space<vmem>>, vector<1x16xf32>,
    %c38_368 = arith.constant 38 : index
    %c0_369 = arith.constant 0 : index
    %230 = vector.load %arg9[%c38_368, %c0_369] : memref<104x16xf32, #tpu.memory_space<vmem>>, vector<1x16xf32>
    %c6_370 = arith.constant 6 : index
    %c208_371 = arith.constant 208 : index
    %231 = vector.load %arg10[%c6_370, %c208_371] : memref<8x256xf32, #tpu.memory_space<vmem>>, vector<1x16xf32>
    tpu.vector_store %arg10[%c6_370, %c208_371], %230 {strides = array<i32>} : memref<8x256xf32, #tpu.memory_space<vmem>>, vector<1x16xf32>,
    %c39 = arith.constant 39 : index
    %c0_372 = arith.constant 0 : index
    %232 = vector.load %arg9[%c39, %c0_372] : memref<104x16xf32, #tpu.memory_space<vmem>>, vector<1x16xf32>
    %c6_373 = arith.constant 6 : index
    %c224_374 = arith.constant 224 : index
    %233 = vector.load %arg10[%c6_373, %c224_374] : memref<8x256xf32, #tpu.memory_space<vmem>>, vector<1x16xf32>
    tpu.vector_store %arg10[%c6_373, %c224_374], %232 {strides = array<i32>} : memref<8x256xf32, #tpu.memory_space<vmem>>, vector<1x16xf32>,
    %c40 = arith.constant 40 : index
    %c0_375 = arith.constant 0 : index
    %234 = vector.load %arg9[%c40, %c0_375] : memref<104x16xf32, #tpu.memory_space<vmem>>, vector<1x16xf32>
    %c6_376 = arith.constant 6 : index
    %c240_377 = arith.constant 240 : index
    %235 = vector.load %arg10[%c6_376, %c240_377] : memref<8x256xf32, #tpu.memory_space<vmem>>, vector<1x16xf32>
    tpu.vector_store %arg10[%c6_376, %c240_377], %234 {strides = array<i32>} : memref<8x256xf32, #tpu.memory_space<vmem>>, vector<1x16xf32>,
    %c65_378 = arith.constant 65 : index
    %c0_379 = arith.constant 0 : index
    %236 = vector.load %arg9[%c65_378, %c0_379] : memref<104x16xf32, #tpu.memory_space<vmem>>, vector<1x16xf32>
    %c7_380 = arith.constant 7 : index
    %c0_381 = arith.constant 0 : index
    %237 = vector.load %arg10[%c7_380, %c0_381] : memref<8x256xf32, #tpu.memory_space<vmem>>, vector<1x16xf32>
    tpu.vector_store %arg10[%c7_380, %c0_381], %236 {strides = array<i32>} : memref<8x256xf32, #tpu.memory_space<vmem>>, vector<1x16xf32>,
    %c66_382 = arith.constant 66 : index
    %c0_383 = arith.constant 0 : index
    %238 = vector.load %arg9[%c66_382, %c0_383] : memref<104x16xf32, #tpu.memory_space<vmem>>, vector<1x16xf32>
    %c7_384 = arith.constant 7 : index
    %c16_385 = arith.constant 16 : index
    %239 = vector.load %arg10[%c7_384, %c16_385] : memref<8x256xf32, #tpu.memory_space<vmem>>, vector<1x16xf32>
    tpu.vector_store %arg10[%c7_384, %c16_385], %238 {strides = array<i32>} : memref<8x256xf32, #tpu.memory_space<vmem>>, vector<1x16xf32>,
    %c67_386 = arith.constant 67 : index
    %c0_387 = arith.constant 0 : index
    %240 = vector.load %arg9[%c67_386, %c0_387] : memref<104x16xf32, #tpu.memory_space<vmem>>, vector<1x16xf32>
    %c7_388 = arith.constant 7 : index
    %c32_389 = arith.constant 32 : index
    %241 = vector.load %arg10[%c7_388, %c32_389] : memref<8x256xf32, #tpu.memory_space<vmem>>, vector<1x16xf32>
    tpu.vector_store %arg10[%c7_388, %c32_389], %240 {strides = array<i32>} : memref<8x256xf32, #tpu.memory_space<vmem>>, vector<1x16xf32>,
    %c68_390 = arith.constant 68 : index
    %c0_391 = arith.constant 0 : index
    %242 = vector.load %arg9[%c68_390, %c0_391] : memref<104x16xf32, #tpu.memory_space<vmem>>, vector<1x16xf32>
    %c7_392 = arith.constant 7 : index
    %c48_393 = arith.constant 48 : index
    %243 = vector.load %arg10[%c7_392, %c48_393] : memref<8x256xf32, #tpu.memory_space<vmem>>, vector<1x16xf32>
    tpu.vector_store %arg10[%c7_392, %c48_393], %242 {strides = array<i32>} : memref<8x256xf32, #tpu.memory_space<vmem>>, vector<1x16xf32>,
    %c72_394 = arith.constant 72 : index
    %c0_395 = arith.constant 0 : index
    %244 = vector.load %arg9[%c72_394, %c0_395] : memref<104x16xf32, #tpu.memory_space<vmem>>, vector<1x16xf32>
    %c7_396 = arith.constant 7 : index
    %c64_397 = arith.constant 64 : index
    %245 = vector.load %arg10[%c7_396, %c64_397] : memref<8x256xf32, #tpu.memory_space<vmem>>, vector<1x16xf32>
    tpu.vector_store %arg10[%c7_396, %c64_397], %244 {strides = array<i32>} : memref<8x256xf32, #tpu.memory_space<vmem>>, vector<1x16xf32>,
    %c73_398 = arith.constant 73 : index
    %c0_399 = arith.constant 0 : index
    %246 = vector.load %arg9[%c73_398, %c0_399] : memref<104x16xf32, #tpu.memory_space<vmem>>, vector<1x16xf32>
    %c7_400 = arith.constant 7 : index
    %c80_401 = arith.constant 80 : index
    %247 = vector.load %arg10[%c7_400, %c80_401] : memref<8x256xf32, #tpu.memory_space<vmem>>, vector<1x16xf32>
    tpu.vector_store %arg10[%c7_400, %c80_401], %246 {strides = array<i32>} : memref<8x256xf32, #tpu.memory_space<vmem>>, vector<1x16xf32>,
    %c74_402 = arith.constant 74 : index
    %c0_403 = arith.constant 0 : index
    %248 = vector.load %arg9[%c74_402, %c0_403] : memref<104x16xf32, #tpu.memory_space<vmem>>, vector<1x16xf32>
    %c7_404 = arith.constant 7 : index
    %c96_405 = arith.constant 96 : index
    %249 = vector.load %arg10[%c7_404, %c96_405] : memref<8x256xf32, #tpu.memory_space<vmem>>, vector<1x16xf32>
    tpu.vector_store %arg10[%c7_404, %c96_405], %248 {strides = array<i32>} : memref<8x256xf32, #tpu.memory_space<vmem>>, vector<1x16xf32>,
    %c75_406 = arith.constant 75 : index
    %c0_407 = arith.constant 0 : index
    %250 = vector.load %arg9[%c75_406, %c0_407] : memref<104x16xf32, #tpu.memory_space<vmem>>, vector<1x16xf32>
    %c7_408 = arith.constant 7 : index
    %c112_409 = arith.constant 112 : index
    %251 = vector.load %arg10[%c7_408, %c112_409] : memref<8x256xf32, #tpu.memory_space<vmem>>, vector<1x16xf32>
    tpu.vector_store %arg10[%c7_408, %c112_409], %250 {strides = array<i32>} : memref<8x256xf32, #tpu.memory_space<vmem>>, vector<1x16xf32>,
    %c79_410 = arith.constant 79 : index
    %c0_411 = arith.constant 0 : index
    %252 = vector.load %arg9[%c79_410, %c0_411] : memref<104x16xf32, #tpu.memory_space<vmem>>, vector<1x16xf32>
    %c7_412 = arith.constant 7 : index
    %c128_413 = arith.constant 128 : index
    %253 = vector.load %arg10[%c7_412, %c128_413] : memref<8x256xf32, #tpu.memory_space<vmem>>, vector<1x16xf32>
    tpu.vector_store %arg10[%c7_412, %c128_413], %252 {strides = array<i32>} : memref<8x256xf32, #tpu.memory_space<vmem>>, vector<1x16xf32>,
    %c80_414 = arith.constant 80 : index
    %c0_415 = arith.constant 0 : index
    %254 = vector.load %arg9[%c80_414, %c0_415] : memref<104x16xf32, #tpu.memory_space<vmem>>, vector<1x16xf32>
    %c7_416 = arith.constant 7 : index
    %c144_417 = arith.constant 144 : index
    %255 = vector.load %arg10[%c7_416, %c144_417] : memref<8x256xf32, #tpu.memory_space<vmem>>, vector<1x16xf32>
    tpu.vector_store %arg10[%c7_416, %c144_417], %254 {strides = array<i32>} : memref<8x256xf32, #tpu.memory_space<vmem>>, vector<1x16xf32>,
    %c81 = arith.constant 81 : index
    %c0_418 = arith.constant 0 : index
    %256 = vector.load %arg9[%c81, %c0_418] : memref<104x16xf32, #tpu.memory_space<vmem>>, vector<1x16xf32>
    %c7_419 = arith.constant 7 : index
    %c160_420 = arith.constant 160 : index
    %257 = vector.load %arg10[%c7_419, %c160_420] : memref<8x256xf32, #tpu.memory_space<vmem>>, vector<1x16xf32>
    tpu.vector_store %arg10[%c7_419, %c160_420], %256 {strides = array<i32>} : memref<8x256xf32, #tpu.memory_space<vmem>>, vector<1x16xf32>,
    %c82 = arith.constant 82 : index
    %c0_421 = arith.constant 0 : index
    %258 = vector.load %arg9[%c82, %c0_421] : memref<104x16xf32, #tpu.memory_space<vmem>>, vector<1x16xf32>
    %c7_422 = arith.constant 7 : index
    %c176_423 = arith.constant 176 : index
    %259 = vector.load %arg10[%c7_422, %c176_423] : memref<8x256xf32, #tpu.memory_space<vmem>>, vector<1x16xf32>
    tpu.vector_store %arg10[%c7_422, %c176_423], %258 {strides = array<i32>} : memref<8x256xf32, #tpu.memory_space<vmem>>, vector<1x16xf32>,
    %c86_424 = arith.constant 86 : index
    %c0_425 = arith.constant 0 : index
    %260 = vector.load %arg9[%c86_424, %c0_425] : memref<104x16xf32, #tpu.memory_space<vmem>>, vector<1x16xf32>
    %c7_426 = arith.constant 7 : index
    %c192_427 = arith.constant 192 : index
    %261 = vector.load %arg10[%c7_426, %c192_427] : memref<8x256xf32, #tpu.memory_space<vmem>>, vector<1x16xf32>
    tpu.vector_store %arg10[%c7_426, %c192_427], %260 {strides = array<i32>} : memref<8x256xf32, #tpu.memory_space<vmem>>, vector<1x16xf32>,
    %c87_428 = arith.constant 87 : index
    %c0_429 = arith.constant 0 : index
    %262 = vector.load %arg9[%c87_428, %c0_429] : memref<104x16xf32, #tpu.memory_space<vmem>>, vector<1x16xf32>
    %c7_430 = arith.constant 7 : index
    %c208_431 = arith.constant 208 : index
    %263 = vector.load %arg10[%c7_430, %c208_431] : memref<8x256xf32, #tpu.memory_space<vmem>>, vector<1x16xf32>
    tpu.vector_store %arg10[%c7_430, %c208_431], %262 {strides = array<i32>} : memref<8x256xf32, #tpu.memory_space<vmem>>, vector<1x16xf32>,
    %c88 = arith.constant 88 : index
    %c0_432 = arith.constant 0 : index
    %264 = vector.load %arg9[%c88, %c0_432] : memref<104x16xf32, #tpu.memory_space<vmem>>, vector<1x16xf32>
    %c7_433 = arith.constant 7 : index
    %c224_434 = arith.constant 224 : index
    %265 = vector.load %arg10[%c7_433, %c224_434] : memref<8x256xf32, #tpu.memory_space<vmem>>, vector<1x16xf32>
    tpu.vector_store %arg10[%c7_433, %c224_434], %264 {strides = array<i32>} : memref<8x256xf32, #tpu.memory_space<vmem>>, vector<1x16xf32>,
    %c89 = arith.constant 89 : index
    %c0_435 = arith.constant 0 : index
    %266 = vector.load %arg9[%c89, %c0_435] : memref<104x16xf32, #tpu.memory_space<vmem>>, vector<1x16xf32>
    %c7_436 = arith.constant 7 : index
    %c240_437 = arith.constant 240 : index
    %267 = vector.load %arg10[%c7_436, %c240_437] : memref<8x256xf32, #tpu.memory_space<vmem>>, vector<1x16xf32>
    tpu.vector_store %arg10[%c7_436, %c240_437], %266 {strides = array<i32>} : memref<8x256xf32, #tpu.memory_space<vmem>>, vector<1x16xf32>,
    %c0_438 = arith.constant 0 : index
    %c0_439 = arith.constant 0 : index
    %268 = vector.load %arg10[%c0_438, %c0_439] : memref<8x256xf32, #tpu.memory_space<vmem>>, vector<8x256xf32>
    %c0_440 = arith.constant 0 : index
    %c0_441 = arith.constant 0 : index
    %269 = vector.load %arg4[%c0_440, %c0_441] : memref<256x32xf32, #tpu.memory_space<vmem>>, vector<256x32xf32>
    %cst_442 = arith.constant dense<0.000000e+00> : vector<8x32xf32>
    %270 = tpu.matmul %268, %269, %cst_442 {dimension_numbers = #tpu.dot_dimension_numbers<[1], [0], [0], [1], [0, 0, 1, 1], [], []>} : vector<8x256xf32>, vector<256x32xf32>, vector<8x32xf32> -> vector<8x32xf32>
    %c0_443 = arith.constant 0 : index
    %c0_444 = arith.constant 0 : index
    %271 = vector.load %arg5[%c0_443, %c0_444] : memref<1x32xf32, #tpu.memory_space<vmem>>, vector<1x32xf32>
    %272 = vector.broadcast %271 : vector<1x32xf32> to vector<8x32xf32>
    %273 = arith.addf %270, %272 : vector<8x32xf32>
    %cst_445 = arith.constant 0.000000e+00 : f32
    %274 = vector.broadcast %cst_445 : f32 to vector<8x32xf32>
    %275 = arith.cmpf oge, %273, %274 : vector<8x32xf32>
    %cst_446 = arith.constant 0.00999999977 : f32
    %276 = vector.broadcast %cst_446 : f32 to vector<8x32xf32>
    %277 = arith.mulf %276, %273 : vector<8x32xf32>
    %278 = arith.select %275, %273, %277 : vector<8x32xi1>, vector<8x32xf32>
    %c0_447 = arith.constant 0 : index
    %c0_448 = arith.constant 0 : index
    %279 = vector.load %arg11[%c0_447, %c0_448] : memref<8x32xf32, #tpu.memory_space<vmem>>, vector<8x32xf32>
    tpu.vector_store %arg11[%c0_447, %c0_448], %278 {strides = array<i32>} : memref<8x32xf32, #tpu.memory_space<vmem>>, vector<8x32xf32>,
    %c0_449 = arith.constant 0 : index
    %c0_450 = arith.constant 0 : index
    %280 = vector.load %arg11[%c0_449, %c0_450] : memref<8x32xf32, #tpu.memory_space<vmem>>, vector<1x32xf32>
    %c0_451 = arith.constant 0 : index
    %c0_452 = arith.constant 0 : index
    %281 = vector.load %arg12[%c0_451, %c0_452] : memref<2x128xf32, #tpu.memory_space<vmem>>, vector<1x32xf32>
    tpu.vector_store %arg12[%c0_451, %c0_452], %280 {strides = array<i32>} : memref<2x128xf32, #tpu.memory_space<vmem>>, vector<1x32xf32>,
    %c2_453 = arith.constant 2 : index
    %c0_454 = arith.constant 0 : index
    %282 = vector.load %arg11[%c2_453, %c0_454] : memref<8x32xf32, #tpu.memory_space<vmem>>, vector<1x32xf32>
    %c0_455 = arith.constant 0 : index
    %c32_456 = arith.constant 32 : index
    %283 = vector.load %arg12[%c0_455, %c32_456] : memref<2x128xf32, #tpu.memory_space<vmem>>, vector<1x32xf32>
    tpu.vector_store %arg12[%c0_455, %c32_456], %282 {strides = array<i32>} : memref<2x128xf32, #tpu.memory_space<vmem>>, vector<1x32xf32>,
    %c4_457 = arith.constant 4 : index
    %c0_458 = arith.constant 0 : index
    %284 = vector.load %arg11[%c4_457, %c0_458] : memref<8x32xf32, #tpu.memory_space<vmem>>, vector<1x32xf32>
    %c0_459 = arith.constant 0 : index
    %c64_460 = arith.constant 64 : index
    %285 = vector.load %arg12[%c0_459, %c64_460] : memref<2x128xf32, #tpu.memory_space<vmem>>, vector<1x32xf32>
    tpu.vector_store %arg12[%c0_459, %c64_460], %284 {strides = array<i32>} : memref<2x128xf32, #tpu.memory_space<vmem>>, vector<1x32xf32>,
    %c6_461 = arith.constant 6 : index
    %c0_462 = arith.constant 0 : index
    %286 = vector.load %arg11[%c6_461, %c0_462] : memref<8x32xf32, #tpu.memory_space<vmem>>, vector<1x32xf32>
    %c0_463 = arith.constant 0 : index
    %c96_464 = arith.constant 96 : index
    %287 = vector.load %arg12[%c0_463, %c96_464] : memref<2x128xf32, #tpu.memory_space<vmem>>, vector<1x32xf32>
    tpu.vector_store %arg12[%c0_463, %c96_464], %286 {strides = array<i32>} : memref<2x128xf32, #tpu.memory_space<vmem>>, vector<1x32xf32>,
    %c1_465 = arith.constant 1 : index
    %c0_466 = arith.constant 0 : index
    %288 = vector.load %arg11[%c1_465, %c0_466] : memref<8x32xf32, #tpu.memory_space<vmem>>, vector<1x32xf32>
    %c1_467 = arith.constant 1 : index
    %c0_468 = arith.constant 0 : index
    %289 = vector.load %arg12[%c1_467, %c0_468] : memref<2x128xf32, #tpu.memory_space<vmem>>, vector<1x32xf32>
    tpu.vector_store %arg12[%c1_467, %c0_468], %288 {strides = array<i32>} : memref<2x128xf32, #tpu.memory_space<vmem>>, vector<1x32xf32>,
    %c3_469 = arith.constant 3 : index
    %c0_470 = arith.constant 0 : index
    %290 = vector.load %arg11[%c3_469, %c0_470] : memref<8x32xf32, #tpu.memory_space<vmem>>, vector<1x32xf32>
    %c1_471 = arith.constant 1 : index
    %c32_472 = arith.constant 32 : index
    %291 = vector.load %arg12[%c1_471, %c32_472] : memref<2x128xf32, #tpu.memory_space<vmem>>, vector<1x32xf32>
    tpu.vector_store %arg12[%c1_471, %c32_472], %290 {strides = array<i32>} : memref<2x128xf32, #tpu.memory_space<vmem>>, vector<1x32xf32>,
    %c5_473 = arith.constant 5 : index
    %c0_474 = arith.constant 0 : index
    %292 = vector.load %arg11[%c5_473, %c0_474] : memref<8x32xf32, #tpu.memory_space<vmem>>, vector<1x32xf32>
    %c1_475 = arith.constant 1 : index
    %c64_476 = arith.constant 64 : index
    %293 = vector.load %arg12[%c1_475, %c64_476] : memref<2x128xf32, #tpu.memory_space<vmem>>, vector<1x32xf32>
    tpu.vector_store %arg12[%c1_475, %c64_476], %292 {strides = array<i32>} : memref<2x128xf32, #tpu.memory_space<vmem>>, vector<1x32xf32>,
    %c7_477 = arith.constant 7 : index
    %c0_478 = arith.constant 0 : index
    %294 = vector.load %arg11[%c7_477, %c0_478] : memref<8x32xf32, #tpu.memory_space<vmem>>, vector<1x32xf32>
    %c1_479 = arith.constant 1 : index
    %c96_480 = arith.constant 96 : index
    %295 = vector.load %arg12[%c1_479, %c96_480] : memref<2x128xf32, #tpu.memory_space<vmem>>, vector<1x32xf32>
    tpu.vector_store %arg12[%c1_479, %c96_480], %294 {strides = array<i32>} : memref<2x128xf32, #tpu.memory_space<vmem>>, vector<1x32xf32>,
    %c0_481 = arith.constant 0 : index
    %c0_482 = arith.constant 0 : index
    %296 = vector.load %arg12[%c0_481, %c0_482] : memref<2x128xf32, #tpu.memory_space<vmem>>, vector<2x128xf32>
    %c0_483 = arith.constant 0 : index
    %c0_484 = arith.constant 0 : index
    %297 = vector.load %arg6[%c0_483, %c0_484] : memref<128x32xf32, #tpu.memory_space<vmem>>, vector<128x32xf32>
    %cst_485 = arith.constant dense<0.000000e+00> : vector<2x32xf32>
    %298 = tpu.matmul %296, %297, %cst_485 {dimension_numbers = #tpu.dot_dimension_numbers<[1], [0], [0], [1], [0, 0, 1, 1], [], []>} : vector<2x128xf32>, vector<128x32xf32>, vector<2x32xf32> -> vector<2x32xf32>
    %c0_486 = arith.constant 0 : index
    %c0_487 = arith.constant 0 : index
    %299 = vector.load %arg7[%c0_486, %c0_487] : memref<1x32xf32, #tpu.memory_space<vmem>>, vector<1x32xf32>
    %300 = vector.broadcast %299 : vector<1x32xf32> to vector<2x32xf32>
    %301 = arith.addf %298, %300 : vector<2x32xf32>
    %cst_488 = arith.constant 0.000000e+00 : f32
    %302 = vector.broadcast %cst_488 : f32 to vector<2x32xf32>
    %303 = arith.cmpf oge, %301, %302 : vector<2x32xf32>
    %cst_489 = arith.constant 0.00999999977 : f32
    %304 = vector.broadcast %cst_489 : f32 to vector<2x32xf32>
    %305 = arith.mulf %304, %301 : vector<2x32xf32>
    %306 = arith.select %303, %301, %305 : vector<2x32xi1>, vector<2x32xf32>
    %c0_490 = arith.constant 0 : index
    %c0_491 = arith.constant 0 : index
    %307 = vector.load %arg8[%c0_490, %c0_491] : memref<2x32xf32, #tpu.memory_space<vmem>>, vector<2x32xf32>
    tpu.vector_store %arg8[%c0_490, %c0_491], %306 {strides = array<i32>} : memref<2x32xf32, #tpu.memory_space<vmem>>, vector<2x32xf32>,
    return
  }
  func.func @transform_0(%arg0: i32) -> (i32, i32) {
    %c0_i32 = arith.constant 0 : i32
    %c0_i32_0 = arith.constant 0 : i32
    %c0_i32_1 = arith.constant 0 : i32
    return %c0_i32, %c0_i32_0 : i32, i32
  }
  func.func @transform_1(%arg0: i32) -> (i32, i32) {
    %c0_i32 = arith.constant 0 : i32
    %c0_i32_0 = arith.constant 0 : i32
    %c0_i32_1 = arith.constant 0 : i32
    return %c0_i32, %c0_i32_0 : i32, i32
  }
  func.func @transform_2(%arg0: i32) -> (i32, i32) {
    %c0_i32 = arith.constant 0 : i32
    %c0_i32_0 = arith.constant 0 : i32
    %c0_i32_1 = arith.constant 0 : i32
    return %c0_i32, %c0_i32_0 : i32, i32
  }
  func.func @transform_3(%arg0: i32) -> (i32, i32) {
    %c0_i32 = arith.constant 0 : i32
    %c0_i32_0 = arith.constant 0 : i32
    %c0_i32_1 = arith.constant 0 : i32
    return %c0_i32, %c0_i32_0 : i32, i32
  }
  func.func @transform_4(%arg0: i32) -> (i32, i32) {
    %c0_i32 = arith.constant 0 : i32
    %c0_i32_0 = arith.constant 0 : i32
    %c0_i32_1 = arith.constant 0 : i32
    return %c0_i32, %c0_i32_0 : i32, i32
  }
  func.func @transform_5(%arg0: i32) -> (i32, i32) {
    %c0_i32 = arith.constant 0 : i32
    %c0_i32_0 = arith.constant 0 : i32
    %c0_i32_1 = arith.constant 0 : i32
    return %c0_i32, %c0_i32_0 : i32, i32
  }
  func.func @transform_6(%arg0: i32) -> (i32, i32) {
    %c0_i32 = arith.constant 0 : i32
    %c0_i32_0 = arith.constant 0 : i32
    %c0_i32_1 = arith.constant 0 : i32
    return %c0_i32, %c0_i32_0 : i32, i32
  }
  func.func @transform_7(%arg0: i32) -> (i32, i32) {
    %c0_i32 = arith.constant 0 : i32
    %c0_i32_0 = arith.constant 0 : i32
    %c0_i32_1 = arith.constant 0 : i32
    return %c0_i32, %c0_i32_0 : i32, i32
  }
}

</mosaic_0001>

<llo_original>
// kernel: simple_visual_encoder_forward.1
$region0: #{simple_visual_encoder_forward.1}
  #allocation0 [shape = 'u32[]', space=smem, size = 0x4, offset = 0x4, fixed_abs, tag = 'smem constant byte address 0x4 - core index']
  #allocation1 [shape = 'u32[144,128]{1,0:T(1,128)}', space=vmem, size = 0x12000, scoped, tag = 'internal scratch']
  #allocation2 [shape = 'f32[104,16]{1,0:T(8,128)}', space=vmem, size = 0xd000, scoped, tag = 'scratch operand']
  #allocation3 [shape = 'f32[8,256]{1,0:T(8,128)}', space=vmem, size = 0x2000, scoped, tag = 'scratch operand']
  #allocation4 [shape = 'f32[8,32]{1,0:T(8,128)}', space=vmem, size = 0x1000, scoped, tag = 'scratch operand']
  #allocation5 [shape = 'f32[2,128]{1,0:T(2,128)}', space=vmem, size = 0x400, scoped, tag = 'scratch operand']
  %s0 = inlined_call_operand.vmem [shape: f32[104,256], index: 0, kind: input, shape index: {}]
  %s1 = inlined_call_operand.vmem [shape: f32[256,16], index: 1, kind: input, shape index: {}]
  %s2 = inlined_call_operand.vmem [shape: f32[1,16], index: 2, kind: input, shape index: {}]
  %s3 = inlined_call_operand.vmem [shape: f32[256,32], index: 3, kind: input, shape index: {}]
  %s4 = inlined_call_operand.vmem [shape: f32[1,32], index: 4, kind: input, shape index: {}]
  %s5 = inlined_call_operand.vmem [shape: f32[128,32], index: 5, kind: input, shape index: {}]
  %s6 = inlined_call_operand.vmem [shape: f32[1,32], index: 6, kind: input, shape index: {}]
  %s7 = inlined_call_operand.hbm [shape: f32[2,32], index: 7, kind: output, shape index: {}]
  %s8 = sld [smem:[#allocation0]]
  $region38: #{simple_visual_encoder_forward.1} parent=0
    _
  %s10 = ssub.s32 1, %s8
  %s11 = scalar_select 0, %s10, %s8
  $region1: #{simple_visual_encoder_forward.1} parent=0
    #allocation6 [shape = 'u8[1024]{0}', space=vmem, size = 0x400, scoped, tag = 'output window, operand 0, single buffered']
    #allocation7 [shape = 's32[1]{0}', space=sflag, size = 0x4, scoped, tag = 'scoped memory for simple_visual_encoder_forward.1']
    %12 = vsyncpa [#allocation7], 0
    // Predicated region
    $region2: #{simple_visual_encoder_forward.1} parent=1 // pred_check
      _
    $region3: #{simple_visual_encoder_forward.1} parent=1 // pred_check_branch
      %14 = sbr.rel (0) target = $region5
    $region4: #{simple_visual_encoder_forward.1} parent=1 // pred_region
      _
    $region5: #{simple_visual_encoder_forward.1} parent=1 // pred_fallthru
      _
    // Predicated region
    $region6: #{simple_visual_encoder_forward.1} parent=1 // pred_check
      _
    $region7: #{simple_visual_encoder_forward.1} parent=1 // pred_check_branch
      %16 = sbr.rel (0) target = $region9
    $region8: #{simple_visual_encoder_forward.1} parent=1 // pred_region
      _
    $region9: #{simple_visual_encoder_forward.1} parent=1 // pred_fallthru
      _
    // Predicated region
    $region10: #{simple_visual_encoder_forward.1} parent=1 // pred_check
      _
    $region11: #{simple_visual_encoder_forward.1} parent=1 // pred_check_branch
      %18 = sbr.rel (0) target = $region13
    $region12: #{simple_visual_encoder_forward.1} parent=1 // pred_region
      _
    $region13: #{simple_visual_encoder_forward.1} parent=1 // pred_fallthru
      _
    // Predicated region
    $region14: #{simple_visual_encoder_forward.1} parent=1 // pred_check
      _
    $region15: #{simple_visual_encoder_forward.1} parent=1 // pred_check_branch
      %20 = sbr.rel (0) target = $region17
    $region16: #{simple_visual_encoder_forward.1} parent=1 // pred_region
      _
    $region17: #{simple_visual_encoder_forward.1} parent=1 // pred_fallthru
      _
    // Predicated region
    $region18: #{simple_visual_encoder_forward.1} parent=1 // pred_check
      _
    $region19: #{simple_visual_encoder_forward.1} parent=1 // pred_check_branch
      %22 = sbr.rel (0) target = $region21
    $region20: #{simple_visual_encoder_forward.1} parent=1 // pred_region
      _
    $region21: #{simple_visual_encoder_forward.1} parent=1 // pred_fallthru
      _
    // Predicated region
    $region22: #{simple_visual_encoder_forward.1} parent=1 // pred_check
      _
    $region23: #{simple_visual_encoder_forward.1} parent=1 // pred_check_branch
      %24 = sbr.rel (0) target = $region25
    $region24: #{simple_visual_encoder_forward.1} parent=1 // pred_region
      _
    $region25: #{simple_visual_encoder_forward.1} parent=1 // pred_fallthru
      _
    // Predicated region
    $region26: #{simple_visual_encoder_forward.1} parent=1 // pred_check
      _
    $region27: #{simple_visual_encoder_forward.1} parent=1 // pred_check_branch
      %26 = sbr.rel (0) target = $region29
    $region28: #{simple_visual_encoder_forward.1} parent=1 // pred_region
      _
    $region29: #{simple_visual_encoder_forward.1} parent=1 // pred_fallthru
      _
    %v27 = vld [vmem:[%s0] sm:$0xff]
    %v28 = vld [vmem:[%s0 + $0x8] sm:$0xff]
    %v29 = vld [vmem:[%s0 + $0x10] sm:$0xff]
    %v30 = vld [vmem:[%s0 + $0x18] sm:$0xff]
    %v31 = vld [vmem:[%s0 + $0x20] sm:$0xff]
    %v32 = vld [vmem:[%s0 + $0x28] sm:$0xff]
    %v33 = vld [vmem:[%s0 + $0x30] sm:$0xff]
    %v34 = vld [vmem:[%s0 + $0x38] sm:$0xff]
    %v35 = vld [vmem:[%s0 + $0x40] sm:$0xff]
    %v36 = vld [vmem:[%s0 + $0x48] sm:$0xff]
    %v37 = vld [vmem:[%s0 + $0x50] sm:$0xff]
    %v38 = vld [vmem:[%s0 + $0x58] sm:$0xff]
    %v39 = vld [vmem:[%s0 + $0x60] sm:$0xff]
    %v40 = vld [vmem:[%s0 + $0x68] sm:$0xff]
    %v41 = vld [vmem:[%s0 + $0x70] sm:$0xff]
    %v42 = vld [vmem:[%s0 + $0x78] sm:$0xff]
    %v43 = vld [vmem:[%s0 + $0x80] sm:$0xff]
    %v44 = vld [vmem:[%s0 + $0x88] sm:$0xff]
    %v45 = vld [vmem:[%s0 + $0x90] sm:$0xff]
    %v46 = vld [vmem:[%s0 + $0x98] sm:$0xff]
    %v47 = vld [vmem:[%s0 + $0xa0] sm:$0xff]
    %v48 = vld [vmem:[%s0 + $0xa8] sm:$0xff]
    %v49 = vld [vmem:[%s0 + $0xb0] sm:$0xff]
    %v50 = vld [vmem:[%s0 + $0xb8] sm:$0xff]
    %v51 = vld [vmem:[%s0 + $0xc0] sm:$0xff]
    %v52 = vld [vmem:[%s0 + $0xc8] sm:$0xff]
    %v53 = vld [vmem:[%s1] sm:$0xff]
    %v54 = vld [vmem:[%s1 + $0x8] sm:$0xff]
    %v55 = vld [vmem:[%s1 + $0x10] sm:$0xff]
    %v56 = vld [vmem:[%s1 + $0x18] sm:$0xff]
    %v57 = vld [vmem:[%s1 + $0x20] sm:$0xff]
    %v58 = vld [vmem:[%s1 + $0x28] sm:$0xff]
    %v59 = vld [vmem:[%s1 + $0x30] sm:$0xff]
    %v60 = vld [vmem:[%s1 + $0x38] sm:$0xff]
    %v61 = vld [vmem:[%s1 + $0x40] sm:$0xff]
    %v62 = vld [vmem:[%s1 + $0x48] sm:$0xff]
    %v63 = vld [vmem:[%s1 + $0x50] sm:$0xff]
    %v64 = vld [vmem:[%s1 + $0x58] sm:$0xff]
    %v65 = vld [vmem:[%s1 + $0x60] sm:$0xff]
    %v66 = vld [vmem:[%s1 + $0x68] sm:$0xff]
    %v67 = vld [vmem:[%s1 + $0x70] sm:$0xff]
    %v68 = vld [vmem:[%s1 + $0x78] sm:$0xff]
    %v69 = vld [vmem:[%s1 + $0x80] sm:$0xff]
    %v70 = vld [vmem:[%s1 + $0x88] sm:$0xff]
    %v71 = vld [vmem:[%s1 + $0x90] sm:$0xff]
    %v72 = vld [vmem:[%s1 + $0x98] sm:$0xff]
    %v73 = vld [vmem:[%s1 + $0xa0] sm:$0xff]
    %v74 = vld [vmem:[%s1 + $0xa8] sm:$0xff]
    %v75 = vld [vmem:[%s1 + $0xb0] sm:$0xff]
    %v76 = vld [vmem:[%s1 + $0xb8] sm:$0xff]
    %v77 = vld [vmem:[%s1 + $0xc0] sm:$0xff]
    %v78 = vld [vmem:[%s1 + $0xc8] sm:$0xff]
    %v79 = vld [vmem:[%s1 + $0xd0] sm:$0xff]
    %v80 = vld [vmem:[%s1 + $0xd8] sm:$0xff]
    %v81 = vld [vmem:[%s1 + $0xe0] sm:$0xff]
    %v82 = vld [vmem:[%s1 + $0xe8] sm:$0xff]
    %v83 = vld [vmem:[%s1 + $0xf0] sm:$0xff]
    %v84 = vld [vmem:[%s1 + $0xf8] sm:$0xff]
    %v85 = vld [vmem:[%s2] sm:$0x1]
    %v87 = vlaneseq
    %v88 = vshrl.u32 %v87, 7
    %v89 = vsub.s32 0, %v88
    %v90 = vrot.slane %v85, %v89
    %92 = vmatprep.subr.mxu0 0.0
    %93 = vmatpush1.msra.mxu0 %v68
    %94 = vmatprep.subr.mxu0 0.0
    %95 = vmatpush1.msra.mxu0 %v67
    %96 = vmatprep.subr.mxu0 0.0
    %97 = vmatpush1.msra.mxu0 %v66
    %98 = vmatprep.subr.mxu0 0.0
    %99 = vmatpush1.msra.mxu0 %v65
    %100 = vmatprep.subr.mxu0 0.0
    %101 = vmatpush1.msra.mxu0 %v64
    %102 = vmatprep.subr.mxu0 0.0
    %103 = vmatpush1.msra.mxu0 %v63
    %104 = vmatprep.subr.mxu0 0.0
    %105 = vmatpush1.msra.mxu0 %v62
    %106 = vmatprep.subr.mxu0 0.0
    %107 = vmatpush1.msra.mxu0 %v61
    %108 = vmatprep.subr.mxu0 0.0
    %109 = vmatpush1.msra.mxu0 %v60
    %110 = vmatprep.subr.mxu0 0.0
    %111 = vmatpush1.msra.mxu0 %v59
    %112 = vmatprep.subr.mxu0 0.0
    %113 = vmatpush1.msra.mxu0 %v58
    %114 = vmatprep.subr.mxu0 0.0
    %115 = vmatpush1.msra.mxu0 %v57
    %116 = vmatprep.subr.mxu0 0.0
    %117 = vmatpush1.msra.mxu0 %v56
    %118 = vmatprep.subr.mxu0 0.0
    %119 = vmatpush1.msra.mxu0 %v55
    %120 = vmatprep.subr.mxu0 0.0
    %121 = vmatpush1.msra.mxu0 %v54
    %122 = vmatprep.subr.mxu0 0.0
    %123 = vmatpush1.msra.mxu0 %v53
    %124 = vmatprep.subr.mxu0 0.0
    %125 = vmatpush2.msra.mxu0 %v84
    %126 = vmatprep.subr.mxu0 0.0
    %127 = vmatpush2.msra.mxu0 %v83
    %128 = vmatprep.subr.mxu0 0.0
    %129 = vmatpush2.msra.mxu0 %v82
    %130 = vmatprep.subr.mxu0 0.0
    %131 = vmatpush2.msra.mxu0 %v81
    %132 = vmatprep.subr.mxu0 0.0
    %133 = vmatpush2.msra.mxu0 %v80
    %134 = vmatprep.subr.mxu0 0.0
    %135 = vmatpush2.msra.mxu0 %v79
    %136 = vmatprep.subr.mxu0 0.0
    %137 = vmatpush2.msra.mxu0 %v78
    %138 = vmatprep.subr.mxu0 0.0
    %139 = vmatpush2.msra.mxu0 %v77
    %140 = vmatprep.subr.mxu0 0.0
    %141 = vmatpush2.msra.mxu0 %v76
    %142 = vmatprep.subr.mxu0 0.0
    %143 = vmatpush2.msra.mxu0 %v75
    %144 = vmatprep.subr.mxu0 0.0
    %145 = vmatpush2.msra.mxu0 %v74
    %146 = vmatprep.subr.mxu0 0.0
    %147 = vmatpush2.msra.mxu0 %v73
    %148 = vmatprep.subr.mxu0 0.0
    %149 = vmatpush2.msra.mxu0 %v72
    %150 = vmatprep.subr.mxu0 0.0
    %151 = vmatpush2.msra.mxu0 %v71
    %152 = vmatprep.subr.mxu0 0.0
    %153 = vmatpush2.msra.mxu0 %v70
    %154 = vmatprep.subr.mxu0 0.0
    %155 = vmatpush2.msra.mxu0 %v69
    %156 = vmatprep.mubr.f32.mxu0 %v28
    %157 = vmatmul.mubr.f32.gmra.mxu0 %v27
    %v158 = vpop.f32.mrf.mxu0
    %v159 = vadd.f32 %v90, %v158
    %v160 = vpop.f32.mrf.mxu0
    %161 = vmatprep.mubr.f32.mxu0 %v30
    %162 = vmatmul.mubr.f32.gmra.mxu0 %v29
    %v163 = vpop.f32.mrf.mxu0
    %v164 = vadd.f32 %v90, %v163
    %v165 = vpop.f32.mrf.mxu0
    %166 = vmatprep.mubr.f32.mxu0 %v32
    %167 = vmatmul.mubr.f32.gmra.mxu0 %v31
    %v168 = vpop.f32.mrf.mxu0
    %v169 = vadd.f32 %v90, %v168
    %v170 = vpop.f32.mrf.mxu0
    %171 = vmatprep.mubr.f32.mxu0 %v34
    %172 = vmatmul.mubr.f32.gmra.mxu0 %v33
    %v173 = vpop.f32.mrf.mxu0
    %v174 = vadd.f32 %v90, %v173
    %v175 = vpop.f32.mrf.mxu0
    %176 = vmatprep.mubr.f32.mxu0 %v36
    %177 = vmatmul.mubr.f32.gmra.mxu0 %v35
    %v178 = vpop.f32.mrf.mxu0
    %v179 = vadd.f32 %v90, %v178
    %v180 = vpop.f32.mrf.mxu0
    %181 = vmatprep.mubr.f32.mxu0 %v38
    %182 = vmatmul.mubr.f32.gmra.mxu0 %v37
    %v183 = vpop.f32.mrf.mxu0
    %v184 = vadd.f32 %v90, %v183
    %v185 = vpop.f32.mrf.mxu0
    %186 = vmatprep.mubr.f32.mxu0 %v40
    %187 = vmatmul.mubr.f32.gmra.mxu0 %v39
    %v188 = vpop.f32.mrf.mxu0
    %v189 = vadd.f32 %v90, %v188
    %v190 = vpop.f32.mrf.mxu0
    %191 = vmatprep.mubr.f32.mxu0 %v42
    %192 = vmatmul.mubr.f32.gmra.mxu0 %v41
    %v193 = vpop.f32.mrf.mxu0
    %v194 = vadd.f32 %v90, %v193
    %v195 = vpop.f32.mrf.mxu0
    %196 = vmatprep.mubr.f32.mxu0 %v44
    %197 = vmatmul.mubr.f32.gmra.mxu0 %v43
    %v198 = vpop.f32.mrf.mxu0
    %v199 = vadd.f32 %v90, %v198
    %v200 = vpop.f32.mrf.mxu0
    %201 = vmatprep.mubr.f32.mxu0 %v46
    %202 = vmatmul.mubr.f32.gmra.mxu0 %v45
    %v203 = vpop.f32.mrf.mxu0
    %v204 = vadd.f32 %v90, %v203
    %v205 = vpop.f32.mrf.mxu0
    %206 = vmatprep.mubr.f32.mxu0 %v48
    %207 = vmatmul.mubr.f32.gmra.mxu0 %v47
    %v208 = vpop.f32.mrf.mxu0
    %v209 = vadd.f32 %v90, %v208
    %v210 = vpop.f32.mrf.mxu0
    %211 = vmatprep.mubr.f32.mxu0 %v50
    %212 = vmatmul.mubr.f32.gmra.mxu0 %v49
    %v213 = vpop.f32.mrf.mxu0
    %v214 = vadd.f32 %v90, %v213
    %v215 = vpop.f32.mrf.mxu0
    %216 = vmatprep.mubr.f32.mxu0 %v52
    %217 = vmatmul.mubr.f32.gmra.mxu0 %v51
    %v218 = vpop.f32.mrf.mxu0
    %v219 = vadd.f32 %v90, %v218
    %v220 = vpop.f32.mrf.mxu0
    %221 = vdwg.mxu0
    %vm222 = vcmp.ge.f32.partialorder %v159, 0.0
    %vm223 = vcmp.ge.f32.partialorder %v164, 0.0
    %vm224 = vcmp.ge.f32.partialorder %v169, 0.0
    %vm225 = vcmp.ge.f32.partialorder %v174, 0.0
    %vm226 = vcmp.ge.f32.partialorder %v179, 0.0
    %vm227 = vcmp.ge.f32.partialorder %v184, 0.0
    %vm228 = vcmp.ge.f32.partialorder %v189, 0.0
    %vm229 = vcmp.ge.f32.partialorder %v194, 0.0
    %vm230 = vcmp.ge.f32.partialorder %v199, 0.0
    %vm231 = vcmp.ge.f32.partialorder %v204, 0.0
    %vm232 = vcmp.ge.f32.partialorder %v209, 0.0
    %vm233 = vcmp.ge.f32.partialorder %v214, 0.0
    %vm234 = vcmp.ge.f32.partialorder %v219, 0.0
    %v235 = vmul.f32 %v159, 0.01
    %v236 = vmul.f32 %v164, 0.01
    %v237 = vmul.f32 %v169, 0.01
    %v238 = vmul.f32 %v174, 0.01
    %v239 = vmul.f32 %v179, 0.01
    %v240 = vmul.f32 %v184, 0.01
    %v241 = vmul.f32 %v189, 0.01
    %v242 = vmul.f32 %v194, 0.01
    %v243 = vmul.f32 %v199, 0.01
    %v244 = vmul.f32 %v204, 0.01
    %v245 = vmul.f32 %v209, 0.01
    %v246 = vmul.f32 %v214, 0.01
    %v247 = vmul.f32 %v219, 0.01
    %v248 = vsel %vm222, %v159, %v235
    %v249 = vsel %vm223, %v164, %v236
    %v250 = vsel %vm224, %v169, %v237
    %v251 = vsel %vm225, %v174, %v238
    %v252 = vsel %vm226, %v179, %v239
    %v253 = vsel %vm227, %v184, %v240
    %v254 = vsel %vm228, %v189, %v241
    %v255 = vsel %vm229, %v194, %v242
    %v256 = vsel %vm230, %v199, %v243
    %v257 = vsel %vm231, %v204, %v244
    %v258 = vsel %vm232, %v209, %v245
    %v259 = vsel %vm233, %v214, %v246
    %v260 = vsel %vm234, %v219, %v247
    %vm261 = vcmask 130048
    %262 = vst.msk [vmem:[#allocation2] sm:$0xff] %vm261, %v248
    %263 = vst.msk [vmem:[#allocation2 + $0x8] sm:$0xff] %vm261, %v249
    %264 = vst.msk [vmem:[#allocation2 + $0x10] sm:$0xff] %vm261, %v250
    %265 = vst.msk [vmem:[#allocation2 + $0x18] sm:$0xff] %vm261, %v251
    %266 = vst.msk [vmem:[#allocation2 + $0x20] sm:$0xff] %vm261, %v252
    %267 = vst.msk [vmem:[#allocation2 + $0x28] sm:$0xff] %vm261, %v253
    %268 = vst.msk [vmem:[#allocation2 + $0x30] sm:$0xff] %vm261, %v254
    %269 = vst.msk [vmem:[#allocation2 + $0x38] sm:$0xff] %vm261, %v255
    %270 = vst.msk [vmem:[#allocation2 + $0x40] sm:$0xff] %vm261, %v256
    %271 = vst.msk [vmem:[#allocation2 + $0x48] sm:$0xff] %vm261, %v257
    %272 = vst.msk [vmem:[#allocation2 + $0x50] sm:$0xff] %vm261, %v258
    %273 = vst.msk [vmem:[#allocation2 + $0x58] sm:$0xff] %vm261, %v259
    %274 = vst.msk [vmem:[#allocation2 + $0x60] sm:$0xff] %vm261, %v260
    %v275 = vld [vmem:[#allocation2] sm:$0x1]
    %vm276 = vcmask 122880
    %277 = vst.msk [vmem:[#allocation3] sm:$0x1] %vm276, %v275
    %v278 = vld [vmem:[#allocation2 + $0x1] sm:$0x1]
    %280 = vrot.lane.b32.xlu0 %v278, 16
    %v281 = vpop.permute.xlu0 %280
    %vm283 = vcmask 254080
    %284 = vst.msk [vmem:[#allocation3] sm:$0x1] %vm283, %v281
    %v285 = vld [vmem:[#allocation2 + $0x2] sm:$0x1]
    %287 = vrot.lane.b32.xlu0 %v285, 32
    %v288 = vpop.permute.xlu0 %287
    %vm290 = vcmask 385280
    %291 = vst.msk [vmem:[#allocation3] sm:$0x1] %vm290, %v288
    %v292 = vld [vmem:[#allocation2 + $0x3] sm:$0x1]
    %294 = vrot.lane.b32.xlu0 %v292, 48
    %v295 = vpop.permute.xlu0 %294
    %vm297 = vcmask 516480
    %298 = vst.msk [vmem:[#allocation3] sm:$0x1] %vm297, %v295
    %v299 = vld [vmem:[#allocation2 + $0x7] sm:$0x1]
    %301 = vrot.lane.b32.xlu0 %v299, 64
    %v302 = vpop.permute.xlu0 %301
    %vm304 = vcmask 647680
    %305 = vst.msk [vmem:[#allocation3] sm:$0x1] %vm304, %v302
    %v306 = vld [vmem:[#allocation2 + $0x8] sm:$0x1]
    %308 = vrot.lane.b32.xlu0 %v306, 80
    %v309 = vpop.permute.xlu0 %308
    %vm311 = vcmask 778880
    %312 = vst.msk [vmem:[#allocation3] sm:$0x1] %vm311, %v309
    %v313 = vld [vmem:[#allocation2 + $0x9] sm:$0x1]
    %315 = vrot.lane.b32.xlu0 %v313, 96
    %v316 = vpop.permute.xlu0 %315
    %vm318 = vcmask 910080
    %319 = vst.msk [vmem:[#allocation3] sm:$0x1] %vm318, %v316
    %v320 = vld [vmem:[#allocation2 + $0xa] sm:$0x1]
    %322 = vrot.lane.b32.xlu0 %v320, 112
    %v323 = vpop.permute.xlu0 %322
    %vm325 = vcmask 1041280
    %326 = vst.msk [vmem:[#allocation3] sm:$0x1] %vm325, %v323
    %v327 = vld [vmem:[#allocation2 + $0xe] sm:$0x1]
    %328 = vst.msk [vmem:[#allocation3 + $0x8] sm:$0x1] %vm276, %v327
    %v329 = vld [vmem:[#allocation2 + $0xf] sm:$0x1]
    %331 = vrot.lane.b32.xlu0 %v329, 16
    %v332 = vpop.permute.xlu0 %331
    %334 = vst.msk [vmem:[#allocation3 + $0x8] sm:$0x1] %vm283, %v332
    %v335 = vld [vmem:[#allocation2 + $0x10] sm:$0x1]
    %337 = vrot.lane.b32.xlu0 %v335, 32
    %v338 = vpop.permute.xlu0 %337
    %340 = vst.msk [vmem:[#allocation3 + $0x8] sm:$0x1] %vm290, %v338
    %v341 = vld [vmem:[#allocation2 + $0x11] sm:$0x1]
    %343 = vrot.lane.b32.xlu0 %v341, 48
    %v344 = vpop.permute.xlu0 %343
    %346 = vst.msk [vmem:[#allocation3 + $0x8] sm:$0x1] %vm297, %v344
    %v347 = vld [vmem:[#allocation2 + $0x15] sm:$0x1]
    %349 = vrot.lane.b32.xlu0 %v347, 64
    %v350 = vpop.permute.xlu0 %349
    %352 = vst.msk [vmem:[#allocation3 + $0x8] sm:$0x1] %vm304, %v350
    %v353 = vld [vmem:[#allocation2 + $0x16] sm:$0x1]
    %355 = vrot.lane.b32.xlu0 %v353, 80
    %v356 = vpop.permute.xlu0 %355
    %358 = vst.msk [vmem:[#allocation3 + $0x8] sm:$0x1] %vm311, %v356
    %v359 = vld [vmem:[#allocation2 + $0x17] sm:$0x1]
    %361 = vrot.lane.b32.xlu0 %v359, 96
    %v362 = vpop.permute.xlu0 %361
    %364 = vst.msk [vmem:[#allocation3 + $0x8] sm:$0x1] %vm318, %v362
    %v365 = vld [vmem:[#allocation2 + $0x18] sm:$0x1]
    %367 = vrot.lane.b32.xlu0 %v365, 112
    %v368 = vpop.permute.xlu0 %367
    %370 = vst.msk [vmem:[#allocation3 + $0x8] sm:$0x1] %vm325, %v368
    %v371 = vld [vmem:[#allocation2 + $0x31] sm:$0x1]
    %372 = vst.msk [vmem:[#allocation3 + $0x1] sm:$0x1] %vm276, %v371
    %v373 = vld [vmem:[#allocation2 + $0x32] sm:$0x1]
    %375 = vrot.lane.b32.xlu0 %v373, 16
    %v376 = vpop.permute.xlu0 %375
    %378 = vst.msk [vmem:[#allocation3 + $0x1] sm:$0x1] %vm283, %v376
    %v379 = vld [vmem:[#allocation2 + $0x33] sm:$0x1]
    %381 = vrot.lane.b32.xlu0 %v379, 32
    %v382 = vpop.permute.xlu0 %381
    %384 = vst.msk [vmem:[#allocation3 + $0x1] sm:$0x1] %vm290, %v382
    %v385 = vld [vmem:[#allocation2 + $0x34] sm:$0x1]
    %387 = vrot.lane.b32.xlu0 %v385, 48
    %v388 = vpop.permute.xlu0 %387
    %390 = vst.msk [vmem:[#allocation3 + $0x1] sm:$0x1] %vm297, %v388
    %v391 = vld [vmem:[#allocation2 + $0x38] sm:$0x1]
    %393 = vrot.lane.b32.xlu0 %v391, 64
    %v394 = vpop.permute.xlu0 %393
    %396 = vst.msk [vmem:[#allocation3 + $0x1] sm:$0x1] %vm304, %v394
    %v397 = vld [vmem:[#allocation2 + $0x39] sm:$0x1]
    %399 = vrot.lane.b32.xlu0 %v397, 80
    %v400 = vpop.permute.xlu0 %399
    %402 = vst.msk [vmem:[#allocation3 + $0x1] sm:$0x1] %vm311, %v400
    %v403 = vld [vmem:[#allocation2 + $0x3a] sm:$0x1]
    %405 = vrot.lane.b32.xlu0 %v403, 96
    %v406 = vpop.permute.xlu0 %405
    %408 = vst.msk [vmem:[#allocation3 + $0x1] sm:$0x1] %vm318, %v406
    %v409 = vld [vmem:[#allocation2 + $0x3b] sm:$0x1]
    %411 = vrot.lane.b32.xlu0 %v409, 112
    %v412 = vpop.permute.xlu0 %411
    %414 = vst.msk [vmem:[#allocation3 + $0x1] sm:$0x1] %vm325, %v412
    %v415 = vld [vmem:[#allocation2 + $0x3f] sm:$0x1]
    %416 = vst.msk [vmem:[#allocation3 + $0x9] sm:$0x1] %vm276, %v415
    %v417 = vld [vmem:[#allocation2 + $0x40] sm:$0x1]
    %419 = vrot.lane.b32.xlu0 %v417, 16
    %v420 = vpop.permute.xlu0 %419
    %422 = vst.msk [vmem:[#allocation3 + $0x9] sm:$0x1] %vm283, %v420
    %v423 = vld [vmem:[#allocation2 + $0x41] sm:$0x1]
    %425 = vrot.lane.b32.xlu0 %v423, 32
    %v426 = vpop.permute.xlu0 %425
    %428 = vst.msk [vmem:[#allocation3 + $0x9] sm:$0x1] %vm290, %v426
    %v429 = vld [vmem:[#allocation2 + $0x42] sm:$0x1]
    %431 = vrot.lane.b32.xlu0 %v429, 48
    %v432 = vpop.permute.xlu0 %431
    %434 = vst.msk [vmem:[#allocation3 + $0x9] sm:$0x1] %vm297, %v432
    %v435 = vld [vmem:[#allocation2 + $0x46] sm:$0x1]
    %437 = vrot.lane.b32.xlu0 %v435, 64
    %v438 = vpop.permute.xlu0 %437
    %440 = vst.msk [vmem:[#allocation3 + $0x9] sm:$0x1] %vm304, %v438
    %v441 = vld [vmem:[#allocation2 + $0x47] sm:$0x1]
    %443 = vrot.lane.b32.xlu0 %v441, 80
    %v444 = vpop.permute.xlu0 %443
    %446 = vst.msk [vmem:[#allocation3 + $0x9] sm:$0x1] %vm311, %v444
    %v447 = vld [vmem:[#allocation2 + $0x48] sm:$0x1]
    %449 = vrot.lane.b32.xlu0 %v447, 96
    %v450 = vpop.permute.xlu0 %449
    %452 = vst.msk [vmem:[#allocation3 + $0x9] sm:$0x1] %vm318, %v450
    %v453 = vld [vmem:[#allocation2 + $0x49] sm:$0x1]
    %455 = vrot.lane.b32.xlu0 %v453, 112
    %v456 = vpop.permute.xlu0 %455
    %458 = vst.msk [vmem:[#allocation3 + $0x9] sm:$0x1] %vm325, %v456
    %v459 = vld [vmem:[#allocation2 + $0x2] sm:$0x1]
    %460 = vst.msk [vmem:[#allocation3 + $0x2] sm:$0x1] %vm276, %v459
    %v461 = vld [vmem:[#allocation2 + $0x3] sm:$0x1]
    %463 = vrot.lane.b32.xlu0 %v461, 16
    %v464 = vpop.permute.xlu0 %463
    %466 = vst.msk [vmem:[#allocation3 + $0x2] sm:$0x1] %vm283, %v464
    %v467 = vld [vmem:[#allocation2 + $0x4] sm:$0x1]
    %469 = vrot.lane.b32.xlu0 %v467, 32
    %v470 = vpop.permute.xlu0 %469
    %472 = vst.msk [vmem:[#allocation3 + $0x2] sm:$0x1] %vm290, %v470
    %v473 = vld [vmem:[#allocation2 + $0x5] sm:$0x1]
    %475 = vrot.lane.b32.xlu0 %v473, 48
    %v476 = vpop.permute.xlu0 %475
    %478 = vst.msk [vmem:[#allocation3 + $0x2] sm:$0x1] %vm297, %v476
    %v479 = vld [vmem:[#allocation2 + $0x9] sm:$0x1]
    %481 = vrot.lane.b32.xlu0 %v479, 64
    %v482 = vpop.permute.xlu0 %481
    %484 = vst.msk [vmem:[#allocation3 + $0x2] sm:$0x1] %vm304, %v482
    %v485 = vld [vmem:[#allocation2 + $0xa] sm:$0x1]
    %487 = vrot.lane.b32.xlu0 %v485, 80
    %v488 = vpop.permute.xlu0 %487
    %490 = vst.msk [vmem:[#allocation3 + $0x2] sm:$0x1] %vm311, %v488
    %v491 = vld [vmem:[#allocation2 + $0xb] sm:$0x1]
    %493 = vrot.lane.b32.xlu0 %v491, 96
    %v494 = vpop.permute.xlu0 %493
    %496 = vst.msk [vmem:[#allocation3 + $0x2] sm:$0x1] %vm318, %v494
    %v497 = vld [vmem:[#allocation2 + $0xc] sm:$0x1]
    %499 = vrot.lane.b32.xlu0 %v497, 112
    %v500 = vpop.permute.xlu0 %499
    %502 = vst.msk [vmem:[#allocation3 + $0x2] sm:$0x1] %vm325, %v500
    %v503 = vld [vmem:[#allocation2 + $0x10] sm:$0x1]
    %504 = vst.msk [vmem:[#allocation3 + $0xa] sm:$0x1] %vm276, %v503
    %v505 = vld [vmem:[#allocation2 + $0x11] sm:$0x1]
    %507 = vrot.lane.b32.xlu0 %v505, 16
    %v508 = vpop.permute.xlu0 %507
    %510 = vst.msk [vmem:[#allocation3 + $0xa] sm:$0x1] %vm283, %v508
    %v511 = vld [vmem:[#allocation2 + $0x12] sm:$0x1]
    %513 = vrot.lane.b32.xlu0 %v511, 32
    %v514 = vpop.permute.xlu0 %513
    %516 = vst.msk [vmem:[#allocation3 + $0xa] sm:$0x1] %vm290, %v514
    %v517 = vld [vmem:[#allocation2 + $0x13] sm:$0x1]
    %519 = vrot.lane.b32.xlu0 %v517, 48
    %v520 = vpop.permute.xlu0 %519
    %522 = vst.msk [vmem:[#allocation3 + $0xa] sm:$0x1] %vm297, %v520
    %v523 = vld [vmem:[#allocation2 + $0x17] sm:$0x1]
    %525 = vrot.lane.b32.xlu0 %v523, 64
    %v526 = vpop.permute.xlu0 %525
    %528 = vst.msk [vmem:[#allocation3 + $0xa] sm:$0x1] %vm304, %v526
    %v529 = vld [vmem:[#allocation2 + $0x18] sm:$0x1]
    %531 = vrot.lane.b32.xlu0 %v529, 80
    %v532 = vpop.permute.xlu0 %531
    %534 = vst.msk [vmem:[#allocation3 + $0xa] sm:$0x1] %vm311, %v532
    %v535 = vld [vmem:[#allocation2 + $0x19] sm:$0x1]
    %537 = vrot.lane.b32.xlu0 %v535, 96
    %v538 = vpop.permute.xlu0 %537
    %540 = vst.msk [vmem:[#allocation3 + $0xa] sm:$0x1] %vm318, %v538
    %v541 = vld [vmem:[#allocation2 + $0x1a] sm:$0x1]
    %543 = vrot.lane.b32.xlu0 %v541, 112
    %v544 = vpop.permute.xlu0 %543
    %546 = vst.msk [vmem:[#allocation3 + $0xa] sm:$0x1] %vm325, %v544
    %v547 = vld [vmem:[#allocation2 + $0x33] sm:$0x1]
    %548 = vst.msk [vmem:[#allocation3 + $0x3] sm:$0x1] %vm276, %v547
    %v549 = vld [vmem:[#allocation2 + $0x34] sm:$0x1]
    %551 = vrot.lane.b32.xlu0 %v549, 16
    %v552 = vpop.permute.xlu0 %551
    %554 = vst.msk [vmem:[#allocation3 + $0x3] sm:$0x1] %vm283, %v552
    %v555 = vld [vmem:[#allocation2 + $0x35] sm:$0x1]
    %557 = vrot.lane.b32.xlu0 %v555, 32
    %v558 = vpop.permute.xlu0 %557
    %560 = vst.msk [vmem:[#allocation3 + $0x3] sm:$0x1] %vm290, %v558
    %v561 = vld [vmem:[#allocation2 + $0x36] sm:$0x1]
    %563 = vrot.lane.b32.xlu0 %v561, 48
    %v564 = vpop.permute.xlu0 %563
    %566 = vst.msk [vmem:[#allocation3 + $0x3] sm:$0x1] %vm297, %v564
    %v567 = vld [vmem:[#allocation2 + $0x3a] sm:$0x1]
    %569 = vrot.lane.b32.xlu0 %v567, 64
    %v570 = vpop.permute.xlu0 %569
    %572 = vst.msk [vmem:[#allocation3 + $0x3] sm:$0x1] %vm304, %v570
    %v573 = vld [vmem:[#allocation2 + $0x3b] sm:$0x1]
    %575 = vrot.lane.b32.xlu0 %v573, 80
    %v576 = vpop.permute.xlu0 %575
    %578 = vst.msk [vmem:[#allocation3 + $0x3] sm:$0x1] %vm311, %v576
    %v579 = vld [vmem:[#allocation2 + $0x3c] sm:$0x1]
    %581 = vrot.lane.b32.xlu0 %v579, 96
    %v582 = vpop.permute.xlu0 %581
    %584 = vst.msk [vmem:[#allocation3 + $0x3] sm:$0x1] %vm318, %v582
    %v585 = vld [vmem:[#allocation2 + $0x3d] sm:$0x1]
    %587 = vrot.lane.b32.xlu0 %v585, 112
    %v588 = vpop.permute.xlu0 %587
    %590 = vst.msk [vmem:[#allocation3 + $0x3] sm:$0x1] %vm325, %v588
    %v591 = vld [vmem:[#allocation2 + $0x41] sm:$0x1]
    %592 = vst.msk [vmem:[#allocation3 + $0xb] sm:$0x1] %vm276, %v591
    %v593 = vld [vmem:[#allocation2 + $0x42] sm:$0x1]
    %595 = vrot.lane.b32.xlu0 %v593, 16
    %v596 = vpop.permute.xlu0 %595
    %598 = vst.msk [vmem:[#allocation3 + $0xb] sm:$0x1] %vm283, %v596
    %v599 = vld [vmem:[#allocation2 + $0x43] sm:$0x1]
    %601 = vrot.lane.b32.xlu0 %v599, 32
    %v602 = vpop.permute.xlu0 %601
    %604 = vst.msk [vmem:[#allocation3 + $0xb] sm:$0x1] %vm290, %v602
    %v605 = vld [vmem:[#allocation2 + $0x44] sm:$0x1]
    %607 = vrot.lane.b32.xlu0 %v605, 48
    %v608 = vpop.permute.xlu0 %607
    %610 = vst.msk [vmem:[#allocation3 + $0xb] sm:$0x1] %vm297, %v608
    %v611 = vld [vmem:[#allocation2 + $0x48] sm:$0x1]
    %613 = vrot.lane.b32.xlu0 %v611, 64
    %v614 = vpop.permute.xlu0 %613
    %616 = vst.msk [vmem:[#allocation3 + $0xb] sm:$0x1] %vm304, %v614
    %v617 = vld [vmem:[#allocation2 + $0x49] sm:$0x1]
    %619 = vrot.lane.b32.xlu0 %v617, 80
    %v620 = vpop.permute.xlu0 %619
    %622 = vst.msk [vmem:[#allocation3 + $0xb] sm:$0x1] %vm311, %v620
    %v623 = vld [vmem:[#allocation2 + $0x4a] sm:$0x1]
    %625 = vrot.lane.b32.xlu0 %v623, 96
    %v626 = vpop.permute.xlu0 %625
    %628 = vst.msk [vmem:[#allocation3 + $0xb] sm:$0x1] %vm318, %v626
    %v629 = vld [vmem:[#allocation2 + $0x4b] sm:$0x1]
    %631 = vrot.lane.b32.xlu0 %v629, 112
    %v632 = vpop.permute.xlu0 %631
    %634 = vst.msk [vmem:[#allocation3 + $0xb] sm:$0x1] %vm325, %v632
    %v635 = vld [vmem:[#allocation2 + $0xe] sm:$0x1]
    %636 = vst.msk [vmem:[#allocation3 + $0x4] sm:$0x1] %vm276, %v635
    %v637 = vld [vmem:[#allocation2 + $0xf] sm:$0x1]
    %639 = vrot.lane.b32.xlu0 %v637, 16
    %v640 = vpop.permute.xlu0 %639
    %642 = vst.msk [vmem:[#allocation3 + $0x4] sm:$0x1] %vm283, %v640
    %v643 = vld [vmem:[#allocation2 + $0x10] sm:$0x1]
    %645 = vrot.lane.b32.xlu0 %v643, 32
    %v646 = vpop.permute.xlu0 %645
    %648 = vst.msk [vmem:[#allocation3 + $0x4] sm:$0x1] %vm290, %v646
    %v649 = vld [vmem:[#allocation2 + $0x11] sm:$0x1]
    %651 = vrot.lane.b32.xlu0 %v649, 48
    %v652 = vpop.permute.xlu0 %651
    %654 = vst.msk [vmem:[#allocation3 + $0x4] sm:$0x1] %vm297, %v652
    %v655 = vld [vmem:[#allocation2 + $0x15] sm:$0x1]
    %657 = vrot.lane.b32.xlu0 %v655, 64
    %v658 = vpop.permute.xlu0 %657
    %660 = vst.msk [vmem:[#allocation3 + $0x4] sm:$0x1] %vm304, %v658
    %v661 = vld [vmem:[#allocation2 + $0x16] sm:$0x1]
    %663 = vrot.lane.b32.xlu0 %v661, 80
    %v664 = vpop.permute.xlu0 %663
    %666 = vst.msk [vmem:[#allocation3 + $0x4] sm:$0x1] %vm311, %v664
    %v667 = vld [vmem:[#allocation2 + $0x17] sm:$0x1]
    %669 = vrot.lane.b32.xlu0 %v667, 96
    %v670 = vpop.permute.xlu0 %669
    %672 = vst.msk [vmem:[#allocation3 + $0x4] sm:$0x1] %vm318, %v670
    %v673 = vld [vmem:[#allocation2 + $0x18] sm:$0x1]
    %675 = vrot.lane.b32.xlu0 %v673, 112
    %v676 = vpop.permute.xlu0 %675
    %678 = vst.msk [vmem:[#allocation3 + $0x4] sm:$0x1] %vm325, %v676
    %v679 = vld [vmem:[#allocation2 + $0x1c] sm:$0x1]
    %680 = vst.msk [vmem:[#allocation3 + $0xc] sm:$0x1] %vm276, %v679
    %v681 = vld [vmem:[#allocation2 + $0x1d] sm:$0x1]
    %683 = vrot.lane.b32.xlu0 %v681, 16
    %v684 = vpop.permute.xlu0 %683
    %686 = vst.msk [vmem:[#allocation3 + $0xc] sm:$0x1] %vm283, %v684
    %v687 = vld [vmem:[#allocation2 + $0x1e] sm:$0x1]
    %689 = vrot.lane.b32.xlu0 %v687, 32
    %v690 = vpop.permute.xlu0 %689
    %692 = vst.msk [vmem:[#allocation3 + $0xc] sm:$0x1] %vm290, %v690
    %v693 = vld [vmem:[#allocation2 + $0x1f] sm:$0x1]
    %695 = vrot.lane.b32.xlu0 %v693, 48
    %v696 = vpop.permute.xlu0 %695
    %698 = vst.msk [vmem:[#allocation3 + $0xc] sm:$0x1] %vm297, %v696
    %v699 = vld [vmem:[#allocation2 + $0x23] sm:$0x1]
    %701 = vrot.lane.b32.xlu0 %v699, 64
    %v702 = vpop.permute.xlu0 %701
    %704 = vst.msk [vmem:[#allocation3 + $0xc] sm:$0x1] %vm304, %v702
    %v705 = vld [vmem:[#allocation2 + $0x24] sm:$0x1]
    %707 = vrot.lane.b32.xlu0 %v705, 80
    %v708 = vpop.permute.xlu0 %707
    %710 = vst.msk [vmem:[#allocation3 + $0xc] sm:$0x1] %vm311, %v708
    %v711 = vld [vmem:[#allocation2 + $0x25] sm:$0x1]
    %713 = vrot.lane.b32.xlu0 %v711, 96
    %v714 = vpop.permute.xlu0 %713
    %716 = vst.msk [vmem:[#allocation3 + $0xc] sm:$0x1] %vm318, %v714
    %v717 = vld [vmem:[#allocation2 + $0x26] sm:$0x1]
    %719 = vrot.lane.b32.xlu0 %v717, 112
    %v720 = vpop.permute.xlu0 %719
    %722 = vst.msk [vmem:[#allocation3 + $0xc] sm:$0x1] %vm325, %v720
    %v723 = vld [vmem:[#allocation2 + $0x3f] sm:$0x1]
    %724 = vst.msk [vmem:[#allocation3 + $0x5] sm:$0x1] %vm276, %v723
    %v725 = vld [vmem:[#allocation2 + $0x40] sm:$0x1]
    %727 = vrot.lane.b32.xlu0 %v725, 16
    %v728 = vpop.permute.xlu0 %727
    %730 = vst.msk [vmem:[#allocation3 + $0x5] sm:$0x1] %vm283, %v728
    %v731 = vld [vmem:[#allocation2 + $0x41] sm:$0x1]
    %733 = vrot.lane.b32.xlu0 %v731, 32
    %v734 = vpop.permute.xlu0 %733
    %736 = vst.msk [vmem:[#allocation3 + $0x5] sm:$0x1] %vm290, %v734
    %v737 = vld [vmem:[#allocation2 + $0x42] sm:$0x1]
    %739 = vrot.lane.b32.xlu0 %v737, 48
    %v740 = vpop.permute.xlu0 %739
    %742 = vst.msk [vmem:[#allocation3 + $0x5] sm:$0x1] %vm297, %v740
    %v743 = vld [vmem:[#allocation2 + $0x46] sm:$0x1]
    %745 = vrot.lane.b32.xlu0 %v743, 64
    %v746 = vpop.permute.xlu0 %745
    %748 = vst.msk [vmem:[#allocation3 + $0x5] sm:$0x1] %vm304, %v746
    %v749 = vld [vmem:[#allocation2 + $0x47] sm:$0x1]
    %751 = vrot.lane.b32.xlu0 %v749, 80
    %v752 = vpop.permute.xlu0 %751
    %754 = vst.msk [vmem:[#allocation3 + $0x5] sm:$0x1] %vm311, %v752
    %v755 = vld [vmem:[#allocation2 + $0x48] sm:$0x1]
    %757 = vrot.lane.b32.xlu0 %v755, 96
    %v758 = vpop.permute.xlu0 %757
    %760 = vst.msk [vmem:[#allocation3 + $0x5] sm:$0x1] %vm318, %v758
    %v761 = vld [vmem:[#allocation2 + $0x49] sm:$0x1]
    %763 = vrot.lane.b32.xlu0 %v761, 112
    %v764 = vpop.permute.xlu0 %763
    %766 = vst.msk [vmem:[#allocation3 + $0x5] sm:$0x1] %vm325, %v764
    %v767 = vld [vmem:[#allocation2 + $0x4d] sm:$0x1]
    %768 = vst.msk [vmem:[#allocation3 + $0xd] sm:$0x1] %vm276, %v767
    %v769 = vld [vmem:[#allocation2 + $0x4e] sm:$0x1]
    %771 = vrot.lane.b32.xlu0 %v769, 16
    %v772 = vpop.permute.xlu0 %771
    %774 = vst.msk [vmem:[#allocation3 + $0xd] sm:$0x1] %vm283, %v772
    %v775 = vld [vmem:[#allocation2 + $0x4f] sm:$0x1]
    %777 = vrot.lane.b32.xlu0 %v775, 32
    %v778 = vpop.permute.xlu0 %777
    %780 = vst.msk [vmem:[#allocation3 + $0xd] sm:$0x1] %vm290, %v778
    %v781 = vld [vmem:[#allocation2 + $0x50] sm:$0x1]
    %783 = vrot.lane.b32.xlu0 %v781, 48
    %v784 = vpop.permute.xlu0 %783
    %786 = vst.msk [vmem:[#allocation3 + $0xd] sm:$0x1] %vm297, %v784
    %v787 = vld [vmem:[#allocation2 + $0x54] sm:$0x1]
    %789 = vrot.lane.b32.xlu0 %v787, 64
    %v790 = vpop.permute.xlu0 %789
    %792 = vst.msk [vmem:[#allocation3 + $0xd] sm:$0x1] %vm304, %v790
    %v793 = vld [vmem:[#allocation2 + $0x55] sm:$0x1]
    %795 = vrot.lane.b32.xlu0 %v793, 80
    %v796 = vpop.permute.xlu0 %795
    %798 = vst.msk [vmem:[#allocation3 + $0xd] sm:$0x1] %vm311, %v796
    %v799 = vld [vmem:[#allocation2 + $0x56] sm:$0x1]
    %801 = vrot.lane.b32.xlu0 %v799, 96
    %v802 = vpop.permute.xlu0 %801
    %804 = vst.msk [vmem:[#allocation3 + $0xd] sm:$0x1] %vm318, %v802
    %v805 = vld [vmem:[#allocation2 + $0x57] sm:$0x1]
    %807 = vrot.lane.b32.xlu0 %v805, 112
    %v808 = vpop.permute.xlu0 %807
    %810 = vst.msk [vmem:[#allocation3 + $0xd] sm:$0x1] %vm325, %v808
    %v811 = vld [vmem:[#allocation2 + $0x10] sm:$0x1]
    %812 = vst.msk [vmem:[#allocation3 + $0x6] sm:$0x1] %vm276, %v811
    %v813 = vld [vmem:[#allocation2 + $0x11] sm:$0x1]
    %815 = vrot.lane.b32.xlu0 %v813, 16
    %v816 = vpop.permute.xlu0 %815
    %818 = vst.msk [vmem:[#allocation3 + $0x6] sm:$0x1] %vm283, %v816
    %v819 = vld [vmem:[#allocation2 + $0x12] sm:$0x1]
    %821 = vrot.lane.b32.xlu0 %v819, 32
    %v822 = vpop.permute.xlu0 %821
    %824 = vst.msk [vmem:[#allocation3 + $0x6] sm:$0x1] %vm290, %v822
    %v825 = vld [vmem:[#allocation2 + $0x13] sm:$0x1]
    %827 = vrot.lane.b32.xlu0 %v825, 48
    %v828 = vpop.permute.xlu0 %827
    %830 = vst.msk [vmem:[#allocation3 + $0x6] sm:$0x1] %vm297, %v828
    %v831 = vld [vmem:[#allocation2 + $0x17] sm:$0x1]
    %833 = vrot.lane.b32.xlu0 %v831, 64
    %v834 = vpop.permute.xlu0 %833
    %836 = vst.msk [vmem:[#allocation3 + $0x6] sm:$0x1] %vm304, %v834
    %v837 = vld [vmem:[#allocation2 + $0x18] sm:$0x1]
    %839 = vrot.lane.b32.xlu0 %v837, 80
    %v840 = vpop.permute.xlu0 %839
    %842 = vst.msk [vmem:[#allocation3 + $0x6] sm:$0x1] %vm311, %v840
    %v843 = vld [vmem:[#allocation2 + $0x19] sm:$0x1]
    %845 = vrot.lane.b32.xlu0 %v843, 96
    %v846 = vpop.permute.xlu0 %845
    %848 = vst.msk [vmem:[#allocation3 + $0x6] sm:$0x1] %vm318, %v846
    %v849 = vld [vmem:[#allocation2 + $0x1a] sm:$0x1]
    %851 = vrot.lane.b32.xlu0 %v849, 112
    %v852 = vpop.permute.xlu0 %851
    %854 = vst.msk [vmem:[#allocation3 + $0x6] sm:$0x1] %vm325, %v852
    %v855 = vld [vmem:[#allocation2 + $0x1e] sm:$0x1]
    %856 = vst.msk [vmem:[#allocation3 + $0xe] sm:$0x1] %vm276, %v855
    %v857 = vld [vmem:[#allocation2 + $0x1f] sm:$0x1]
    %859 = vrot.lane.b32.xlu0 %v857, 16
    %v860 = vpop.permute.xlu0 %859
    %862 = vst.msk [vmem:[#allocation3 + $0xe] sm:$0x1] %vm283, %v860
    %v863 = vld [vmem:[#allocation2 + $0x20] sm:$0x1]
    %865 = vrot.lane.b32.xlu0 %v863, 32
    %v866 = vpop.permute.xlu0 %865
    %868 = vst.msk [vmem:[#allocation3 + $0xe] sm:$0x1] %vm290, %v866
    %v869 = vld [vmem:[#allocation2 + $0x21] sm:$0x1]
    %871 = vrot.lane.b32.xlu0 %v869, 48
    %v872 = vpop.permute.xlu0 %871
    %874 = vst.msk [vmem:[#allocation3 + $0xe] sm:$0x1] %vm297, %v872
    %v875 = vld [vmem:[#allocation2 + $0x25] sm:$0x1]
    %877 = vrot.lane.b32.xlu0 %v875, 64
    %v878 = vpop.permute.xlu0 %877
    %880 = vst.msk [vmem:[#allocation3 + $0xe] sm:$0x1] %vm304, %v878
    %v881 = vld [vmem:[#allocation2 + $0x26] sm:$0x1]
    %883 = vrot.lane.b32.xlu0 %v881, 80
    %v884 = vpop.permute.xlu0 %883
    %886 = vst.msk [vmem:[#allocation3 + $0xe] sm:$0x1] %vm311, %v884
    %v887 = vld [vmem:[#allocation2 + $0x27] sm:$0x1]
    %889 = vrot.lane.b32.xlu0 %v887, 96
    %v890 = vpop.permute.xlu0 %889
    %892 = vst.msk [vmem:[#allocation3 + $0xe] sm:$0x1] %vm318, %v890
    %v893 = vld [vmem:[#allocation2 + $0x28] sm:$0x1]
    %895 = vrot.lane.b32.xlu0 %v893, 112
    %v896 = vpop.permute.xlu0 %895
    %898 = vst.msk [vmem:[#allocation3 + $0xe] sm:$0x1] %vm325, %v896
    %v899 = vld [vmem:[#allocation2 + $0x41] sm:$0x1]
    %900 = vst.msk [vmem:[#allocation3 + $0x7] sm:$0x1] %vm276, %v899
    %v901 = vld [vmem:[#allocation2 + $0x42] sm:$0x1]
    %903 = vrot.lane.b32.xlu0 %v901, 16
    %v904 = vpop.permute.xlu0 %903
    %906 = vst.msk [vmem:[#allocation3 + $0x7] sm:$0x1] %vm283, %v904
    %v907 = vld [vmem:[#allocation2 + $0x43] sm:$0x1]
    %909 = vrot.lane.b32.xlu0 %v907, 32
    %v910 = vpop.permute.xlu0 %909
    %912 = vst.msk [vmem:[#allocation3 + $0x7] sm:$0x1] %vm290, %v910
    %v913 = vld [vmem:[#allocation2 + $0x44] sm:$0x1]
    %915 = vrot.lane.b32.xlu0 %v913, 48
    %v916 = vpop.permute.xlu0 %915
    %918 = vst.msk [vmem:[#allocation3 + $0x7] sm:$0x1] %vm297, %v916
    %v919 = vld [vmem:[#allocation2 + $0x48] sm:$0x1]
    %921 = vrot.lane.b32.xlu0 %v919, 64
    %v922 = vpop.permute.xlu0 %921
    %924 = vst.msk [vmem:[#allocation3 + $0x7] sm:$0x1] %vm304, %v922
    %v925 = vld [vmem:[#allocation2 + $0x49] sm:$0x1]
    %927 = vrot.lane.b32.xlu0 %v925, 80
    %v928 = vpop.permute.xlu0 %927
    %930 = vst.msk [vmem:[#allocation3 + $0x7] sm:$0x1] %vm311, %v928
    %v931 = vld [vmem:[#allocation2 + $0x4a] sm:$0x1]
    %933 = vrot.lane.b32.xlu0 %v931, 96
    %v934 = vpop.permute.xlu0 %933
    %936 = vst.msk [vmem:[#allocation3 + $0x7] sm:$0x1] %vm318, %v934
    %v937 = vld [vmem:[#allocation2 + $0x4b] sm:$0x1]
    %939 = vrot.lane.b32.xlu0 %v937, 112
    %v940 = vpop.permute.xlu0 %939
    %942 = vst.msk [vmem:[#allocation3 + $0x7] sm:$0x1] %vm325, %v940
    %v943 = vld [vmem:[#allocation2 + $0x4f] sm:$0x1]
    %944 = vst.msk [vmem:[#allocation3 + $0xf] sm:$0x1] %vm276, %v943
    %v945 = vld [vmem:[#allocation2 + $0x50] sm:$0x1]
    %947 = vrot.lane.b32.xlu0 %v945, 16
    %v948 = vpop.permute.xlu0 %947
    %950 = vst.msk [vmem:[#allocation3 + $0xf] sm:$0x1] %vm283, %v948
    %v951 = vld [vmem:[#allocation2 + $0x51] sm:$0x1]
    %953 = vrot.lane.b32.xlu0 %v951, 32
    %v954 = vpop.permute.xlu0 %953
    %956 = vst.msk [vmem:[#allocation3 + $0xf] sm:$0x1] %vm290, %v954
    %v957 = vld [vmem:[#allocation2 + $0x52] sm:$0x1]
    %959 = vrot.lane.b32.xlu0 %v957, 48
    %v960 = vpop.permute.xlu0 %959
    %962 = vst.msk [vmem:[#allocation3 + $0xf] sm:$0x1] %vm297, %v960
    %v963 = vld [vmem:[#allocation2 + $0x56] sm:$0x1]
    %965 = vrot.lane.b32.xlu0 %v963, 64
    %v966 = vpop.permute.xlu0 %965
    %968 = vst.msk [vmem:[#allocation3 + $0xf] sm:$0x1] %vm304, %v966
    %v969 = vld [vmem:[#allocation2 + $0x57] sm:$0x1]
    %971 = vrot.lane.b32.xlu0 %v969, 80
    %v972 = vpop.permute.xlu0 %971
    %974 = vst.msk [vmem:[#allocation3 + $0xf] sm:$0x1] %vm311, %v972
    %v975 = vld [vmem:[#allocation2 + $0x58] sm:$0x1]
    %977 = vrot.lane.b32.xlu0 %v975, 96
    %v978 = vpop.permute.xlu0 %977
    %980 = vst.msk [vmem:[#allocation3 + $0xf] sm:$0x1] %vm318, %v978
    %v981 = vld [vmem:[#allocation2 + $0x59] sm:$0x1]
    %983 = vrot.lane.b32.xlu0 %v981, 112
    %v984 = vpop.permute.xlu0 %983
    %986 = vst.msk [vmem:[#allocation3 + $0xf] sm:$0x1] %vm325, %v984
    %v987 = vld [vmem:[#allocation3] sm:$0xff]
    %v988 = vld [vmem:[#allocation3 + $0x8] sm:$0xff]
    %v989 = vld [vmem:[%s3] sm:$0xff]
    %v990 = vld [vmem:[%s3 + $0x8] sm:$0xff]
    %v991 = vld [vmem:[%s3 + $0x10] sm:$0xff]
    %v992 = vld [vmem:[%s3 + $0x18] sm:$0xff]
    %v993 = vld [vmem:[%s3 + $0x20] sm:$0xff]
    %v994 = vld [vmem:[%s3 + $0x28] sm:$0xff]
    %v995 = vld [vmem:[%s3 + $0x30] sm:$0xff]
    %v996 = vld [vmem:[%s3 + $0x38] sm:$0xff]
    %v997 = vld [vmem:[%s3 + $0x40] sm:$0xff]
    %v998 = vld [vmem:[%s3 + $0x48] sm:$0xff]
    %v999 = vld [vmem:[%s3 + $0x50] sm:$0xff]
    %v1000 = vld [vmem:[%s3 + $0x58] sm:$0xff]
    %v1001 = vld [vmem:[%s3 + $0x60] sm:$0xff]
    %v1002 = vld [vmem:[%s3 + $0x68] sm:$0xff]
    %v1003 = vld [vmem:[%s3 + $0x70] sm:$0xff]
    %v1004 = vld [vmem:[%s3 + $0x78] sm:$0xff]
    %v1005 = vld [vmem:[%s3 + $0x80] sm:$0xff]
    %v1006 = vld [vmem:[%s3 + $0x88] sm:$0xff]
    %v1007 = vld [vmem:[%s3 + $0x90] sm:$0xff]
    %v1008 = vld [vmem:[%s3 + $0x98] sm:$0xff]
    %v1009 = vld [vmem:[%s3 + $0xa0] sm:$0xff]
    %v1010 = vld [vmem:[%s3 + $0xa8] sm:$0xff]
    %v1011 = vld [vmem:[%s3 + $0xb0] sm:$0xff]
    %v1012 = vld [vmem:[%s3 + $0xb8] sm:$0xff]
    %v1013 = vld [vmem:[%s3 + $0xc0] sm:$0xff]
    %v1014 = vld [vmem:[%s3 + $0xc8] sm:$0xff]
    %v1015 = vld [vmem:[%s3 + $0xd0] sm:$0xff]
    %v1016 = vld [vmem:[%s3 + $0xd8] sm:$0xff]
    %v1017 = vld [vmem:[%s3 + $0xe0] sm:$0xff]
    %v1018 = vld [vmem:[%s3 + $0xe8] sm:$0xff]
    %v1019 = vld [vmem:[%s3 + $0xf0] sm:$0xff]
    %v1020 = vld [vmem:[%s3 + $0xf8] sm:$0xff]
    %v1021 = vld [vmem:[%s4] sm:$0x1]
    %v1023 = vlaneseq
    %v1024 = vshrl.u32 %v1023, 7
    %v1025 = vsub.s32 0, %v1024
    %v1026 = vrot.slane %v1021, %v1025
    %1028 = vmatprep.subr.mxu0 0.0
    %1029 = vmatpush1.msra.mxu0 %v1004
    %1030 = vmatprep.subr.mxu0 0.0
    %1031 = vmatpush1.msra.mxu0 %v1003
    %1032 = vmatprep.subr.mxu0 0.0
    %1033 = vmatpush1.msra.mxu0 %v1002
    %1034 = vmatprep.subr.mxu0 0.0
    %1035 = vmatpush1.msra.mxu0 %v1001
    %1036 = vmatprep.subr.mxu0 0.0
    %1037 = vmatpush1.msra.mxu0 %v1000
    %1038 = vmatprep.subr.mxu0 0.0
    %1039 = vmatpush1.msra.mxu0 %v999
    %1040 = vmatprep.subr.mxu0 0.0
    %1041 = vmatpush1.msra.mxu0 %v998
    %1042 = vmatprep.subr.mxu0 0.0
    %1043 = vmatpush1.msra.mxu0 %v997
    %1044 = vmatprep.subr.mxu0 0.0
    %1045 = vmatpush1.msra.mxu0 %v996
    %1046 = vmatprep.subr.mxu0 0.0
    %1047 = vmatpush1.msra.mxu0 %v995
    %1048 = vmatprep.subr.mxu0 0.0
    %1049 = vmatpush1.msra.mxu0 %v994
    %1050 = vmatprep.subr.mxu0 0.0
    %1051 = vmatpush1.msra.mxu0 %v993
    %1052 = vmatprep.subr.mxu0 0.0
    %1053 = vmatpush1.msra.mxu0 %v992
    %1054 = vmatprep.subr.mxu0 0.0
    %1055 = vmatpush1.msra.mxu0 %v991
    %1056 = vmatprep.subr.mxu0 0.0
    %1057 = vmatpush1.msra.mxu0 %v990
    %1058 = vmatprep.subr.mxu0 0.0
    %1059 = vmatpush1.msra.mxu0 %v989
    %1060 = vmatprep.subr.mxu0 0.0
    %1061 = vmatpush2.msra.mxu0 %v1020
    %1062 = vmatprep.subr.mxu0 0.0
    %1063 = vmatpush2.msra.mxu0 %v1019
    %1064 = vmatprep.subr.mxu0 0.0
    %1065 = vmatpush2.msra.mxu0 %v1018
    %1066 = vmatprep.subr.mxu0 0.0
    %1067 = vmatpush2.msra.mxu0 %v1017
    %1068 = vmatprep.subr.mxu0 0.0
    %1069 = vmatpush2.msra.mxu0 %v1016
    %1070 = vmatprep.subr.mxu0 0.0
    %1071 = vmatpush2.msra.mxu0 %v1015
    %1072 = vmatprep.subr.mxu0 0.0
    %1073 = vmatpush2.msra.mxu0 %v1014
    %1074 = vmatprep.subr.mxu0 0.0
    %1075 = vmatpush2.msra.mxu0 %v1013
    %1076 = vmatprep.subr.mxu0 0.0
    %1077 = vmatpush2.msra.mxu0 %v1012
    %1078 = vmatprep.subr.mxu0 0.0
    %1079 = vmatpush2.msra.mxu0 %v1011
    %1080 = vmatprep.subr.mxu0 0.0
    %1081 = vmatpush2.msra.mxu0 %v1010
    %1082 = vmatprep.subr.mxu0 0.0
    %1083 = vmatpush2.msra.mxu0 %v1009
    %1084 = vmatprep.subr.mxu0 0.0
    %1085 = vmatpush2.msra.mxu0 %v1008
    %1086 = vmatprep.subr.mxu0 0.0
    %1087 = vmatpush2.msra.mxu0 %v1007
    %1088 = vmatprep.subr.mxu0 0.0
    %1089 = vmatpush2.msra.mxu0 %v1006
    %1090 = vmatprep.subr.mxu0 0.0
    %1091 = vmatpush2.msra.mxu0 %v1005
    %1092 = vmatprep.mubr.f32.mxu0 %v988
    %1093 = vmatmul.mubr.f32.gmra.mxu0 %v987
    %v1094 = vpop.f32.mrf.mxu0
    %v1095 = vadd.f32 %v1026, %v1094
    %v1096 = vpop.f32.mrf.mxu0
    %1097 = vdwg.mxu0
    %vm1098 = vcmp.ge.f32.partialorder %v1095, 0.0
    %v1099 = vmul.f32 %v1095, 0.01
    %v1100 = vsel %vm1098, %v1095, %v1099
    %vm1101 = vcmask 261120
    %1102 = vst.msk [vmem:[#allocation4] sm:$0xff] %vm1101, %v1100
    %v1103 = vld [vmem:[#allocation4] sm:$0x1]
    %vm1104 = vcmask 253952
    %1105 = vst.msk [vmem:[#allocation5] sm:$0x1] %vm1104, %v1103
    %v1106 = vld [vmem:[#allocation4 + $0x2] sm:$0x1]
    %1108 = vrot.lane.b32.xlu0 %v1106, 32
    %v1109 = vpop.permute.xlu0 %1108
    %vm1111 = vcmask 516352
    %1112 = vst.msk [vmem:[#allocation5] sm:$0x1] %vm1111, %v1109
    %v1113 = vld [vmem:[#allocation4 + $0x4] sm:$0x1]
    %1115 = vrot.lane.b32.xlu0 %v1113, 64
    %v1116 = vpop.permute.xlu0 %1115
    %vm1118 = vcmask 778752
    %1119 = vst.msk [vmem:[#allocation5] sm:$0x1] %vm1118, %v1116
    %v1120 = vld [vmem:[#allocation4 + $0x6] sm:$0x1]
    %1122 = vrot.lane.b32.xlu0 %v1120, 96
    %v1123 = vpop.permute.xlu0 %1122
    %vm1125 = vcmask 1041152
    %1126 = vst.msk [vmem:[#allocation5] sm:$0x1] %vm1125, %v1123
    %v1127 = vld [vmem:[#allocation4 + $0x1] sm:$0x1]
    %1128 = vst.msk [vmem:[#allocation5 + $0x1] sm:$0x1] %vm1104, %v1127
    %v1129 = vld [vmem:[#allocation4 + $0x3] sm:$0x1]
    %1131 = vrot.lane.b32.xlu0 %v1129, 32
    %v1132 = vpop.permute.xlu0 %1131
    %1134 = vst.msk [vmem:[#allocation5 + $0x1] sm:$0x1] %vm1111, %v1132
    %v1135 = vld [vmem:[#allocation4 + $0x5] sm:$0x1]
    %1137 = vrot.lane.b32.xlu0 %v1135, 64
    %v1138 = vpop.permute.xlu0 %1137
    %1140 = vst.msk [vmem:[#allocation5 + $0x1] sm:$0x1] %vm1118, %v1138
    %v1141 = vld [vmem:[#allocation4 + $0x7] sm:$0x1]
    %1143 = vrot.lane.b32.xlu0 %v1141, 96
    %v1144 = vpop.permute.xlu0 %1143
    %1146 = vst.msk [vmem:[#allocation5 + $0x1] sm:$0x1] %vm1125, %v1144
    %v1147 = vld [vmem:[#allocation5] sm:$0x3]
    %v1148 = vld [vmem:[%s5] sm:$0xff]
    %v1149 = vld [vmem:[%s5 + $0x8] sm:$0xff]
    %v1150 = vld [vmem:[%s5 + $0x10] sm:$0xff]
    %v1151 = vld [vmem:[%s5 + $0x18] sm:$0xff]
    %v1152 = vld [vmem:[%s5 + $0x20] sm:$0xff]
    %v1153 = vld [vmem:[%s5 + $0x28] sm:$0xff]
    %v1154 = vld [vmem:[%s5 + $0x30] sm:$0xff]
    %v1155 = vld [vmem:[%s5 + $0x38] sm:$0xff]
    %v1156 = vld [vmem:[%s5 + $0x40] sm:$0xff]
    %v1157 = vld [vmem:[%s5 + $0x48] sm:$0xff]
    %v1158 = vld [vmem:[%s5 + $0x50] sm:$0xff]
    %v1159 = vld [vmem:[%s5 + $0x58] sm:$0xff]
    %v1160 = vld [vmem:[%s5 + $0x60] sm:$0xff]
    %v1161 = vld [vmem:[%s5 + $0x68] sm:$0xff]
    %v1162 = vld [vmem:[%s5 + $0x70] sm:$0xff]
    %v1163 = vld [vmem:[%s5 + $0x78] sm:$0xff]
    %v1164 = vld [vmem:[%s6] sm:$0x1]
    %v1166 = vlaneseq
    %v1167 = vshrl.u32 %v1166, 7
    %v1168 = vsub.s32 0, %v1167
    %v1169 = vrot.slane %v1164, %v1168
    %1171 = vmatprep.subr.mxu0 0.0
    %1172 = vmatpush1.msra.mxu0 %v1163
    %1173 = vmatprep.subr.mxu0 0.0
    %1174 = vmatpush1.msra.mxu0 %v1162
    %1175 = vmatprep.subr.mxu0 0.0
    %1176 = vmatpush1.msra.mxu0 %v1161
    %1177 = vmatprep.subr.mxu0 0.0
    %1178 = vmatpush1.msra.mxu0 %v1160
    %1179 = vmatprep.subr.mxu0 0.0
    %1180 = vmatpush1.msra.mxu0 %v1159
    %1181 = vmatprep.subr.mxu0 0.0
    %1182 = vmatpush1.msra.mxu0 %v1158
    %1183 = vmatprep.subr.mxu0 0.0
    %1184 = vmatpush1.msra.mxu0 %v1157
    %1185 = vmatprep.subr.mxu0 0.0
    %1186 = vmatpush1.msra.mxu0 %v1156
    %1187 = vmatprep.subr.mxu0 0.0
    %1188 = vmatpush1.msra.mxu0 %v1155
    %1189 = vmatprep.subr.mxu0 0.0
    %1190 = vmatpush1.msra.mxu0 %v1154
    %1191 = vmatprep.subr.mxu0 0.0
    %1192 = vmatpush1.msra.mxu0 %v1153
    %1193 = vmatprep.subr.mxu0 0.0
    %1194 = vmatpush1.msra.mxu0 %v1152
    %1195 = vmatprep.subr.mxu0 0.0
    %1196 = vmatpush1.msra.mxu0 %v1151
    %1197 = vmatprep.subr.mxu0 0.0
    %1198 = vmatpush1.msra.mxu0 %v1150
    %1199 = vmatprep.subr.mxu0 0.0
    %1200 = vmatpush1.msra.mxu0 %v1149
    %1201 = vmatprep.subr.mxu0 0.0
    %1202 = vmatpush1.msra.mxu0 %v1148
    %1203 = vmatprep.subr.mxu0 0.0
    %1204 = vmatpush2.msra.mxu0 0.0
    %1205 = vmatprep.subr.mxu0 0.0
    %1206 = vmatpush2.msra.mxu0 0.0
    %1207 = vmatprep.subr.mxu0 0.0
    %1208 = vmatpush2.msra.mxu0 0.0
    %1209 = vmatprep.subr.mxu0 0.0
    %1210 = vmatpush2.msra.mxu0 0.0
    %1211 = vmatprep.subr.mxu0 0.0
    %1212 = vmatpush2.msra.mxu0 0.0
    %1213 = vmatprep.subr.mxu0 0.0
    %1214 = vmatpush2.msra.mxu0 0.0
    %1215 = vmatprep.subr.mxu0 0.0
    %1216 = vmatpush2.msra.mxu0 0.0
    %1217 = vmatprep.subr.mxu0 0.0
    %1218 = vmatpush2.msra.mxu0 0.0
    %1219 = vmatprep.subr.mxu0 0.0
    %1220 = vmatpush2.msra.mxu0 0.0
    %1221 = vmatprep.subr.mxu0 0.0
    %1222 = vmatpush2.msra.mxu0 0.0
    %1223 = vmatprep.subr.mxu0 0.0
    %1224 = vmatpush2.msra.mxu0 0.0
    %1225 = vmatprep.subr.mxu0 0.0
    %1226 = vmatpush2.msra.mxu0 0.0
    %1227 = vmatprep.subr.mxu0 0.0
    %1228 = vmatpush2.msra.mxu0 0.0
    %1229 = vmatprep.subr.mxu0 0.0
    %1230 = vmatpush2.msra.mxu0 0.0
    %1231 = vmatprep.subr.mxu0 0.0
    %1232 = vmatpush2.msra.mxu0 0.0
    %1233 = vmatprep.subr.mxu0 0.0
    %1234 = vmatpush2.msra.mxu0 0.0
    %1235 = vmatprep.mubr.f32.mxu0 0.0
    %1236 = vmatmul.mubr.f32.gmra.mxu0 %v1147
    %v1237 = vpop.f32.mrf.mxu0
    %v1238 = vadd.f32 %v1169, %v1237
    %v1239 = vpop.f32.mrf.mxu0
    %1240 = vdwg.mxu0
    %vm1241 = vcmp.ge.f32.partialorder %v1238, 0.0
    %v1242 = vmul.f32 %v1238, 0.01
    %v1243 = vsel %vm1241, %v1238, %v1242
    %vm1244 = vcmask 254976
    %1245 = vst.msk [vmem:[#allocation6] sm:$0x3] %vm1244, %v1243
    // Predicated region
    $region30: #{simple_visual_encoder_forward.1} parent=1 // pred_check
      _
    $region31: #{simple_visual_encoder_forward.1} parent=1 // pred_check_branch
      %1247 = sbr.rel (0) target = $region33
    $region32: #{simple_visual_encoder_forward.1} parent=1 // pred_region
      %s1249 = ssub.s32 32, 32
      %1250 = vsyncadd [#allocation7], %s1249
      %s1252 = sshll.u32 [#allocation6], 4
      %s1253 = int_to_ptr.vmem [resolvable:$true] %s1252
      %1255 = dma.vmem_to_hbm [thread:$0]  %s1253, 32, %s7, [#allocation7]
    $region33: #{simple_visual_encoder_forward.1} parent=1 // pred_fallthru
      _
    // Predicated region
    $region34: #{simple_visual_encoder_forward.1} parent=1 // pred_check
      _
    $region35: #{simple_visual_encoder_forward.1} parent=1 // pred_check_branch
      %1257 = sbr.rel (0) target = $region37
    $region36: #{simple_visual_encoder_forward.1} parent=1 // pred_region
      %1258 = dma.done [#allocation7], 32
    $region37: #{simple_visual_encoder_forward.1} parent=1 // pred_fallthru
      _
    %1259 = vsyncpa [#allocation7], 1

</llo_original>
